<compile_context>
chip_gen: v7x
topology: tpu7x:2x2x1
jax: 0.10.0
libtpu: 0.0.40
codegen_flags: <defaults>
</compile_context>

<pallas_src>
import jax
import jax.numpy as jnp
from jax import lax
from jax.experimental import pallas as pl
from jax.experimental.pallas import tpu as pltpu


def _round_up(x, m):
    return (x + m - 1) // m * m


def _num_tensorcores():
    # Split the batch only when a second TensorCore actually exists (v7x). On 1-TC
    # chips (v5e/v6e) the split just doubles serial grid steps and halves matmul M.
    try:
        kind = str(jax.devices()[0].device_kind).lower()
    except Exception:
        return 1
    if "v7" in kind or "7x" in kind:
        return 2
    return 1


# --------------------------------------------------------------------------------------
# One-time parameter preparation (hoisted out of the per-call path).
# --------------------------------------------------------------------------------------
def prepare_params(emb_table, w_ih, w_hh, b_ih, b_hh):
    V, E = emb_table.shape
    H = w_hh.shape[1]
    Ep = _round_up(E, 128)   # lanes
    Hp = _round_up(H, 128)   # lanes (per-gate slab width)

    def pad_gates_T(w, in_dim, in_dim_p):
        # w: (3H, in_dim) -> (in_dim_p, 3*Hp) bf16, each gate in its own Hp-wide lane slab.
        out = jnp.zeros((in_dim_p, 3 * Hp), jnp.bfloat16)
        for g in range(3):
            blk = jnp.transpose(w[g * H:(g + 1) * H, :]).astype(jnp.bfloat16)
            out = out.at[:in_dim, g * Hp:g * Hp + H].set(blk)
        return out

    def pad_bias(b3h):
        out = jnp.zeros((1, 3 * Hp), jnp.float32)
        for g in range(3):
            out = out.at[0, g * Hp:g * Hp + H].set(b3h[g * H:(g + 1) * H].astype(jnp.float32))
        return out

    w_ih_t = pad_gates_T(w_ih, E, Ep)                   # (Ep, 3Hp) bf16
    w_hh_t = pad_gates_T(w_hh, H, Hp)                   # (Hp, 3Hp) bf16
    b_i = pad_bias(b_ih)
    b_h = pad_bias(b_hh)
    b_gi = b_i.at[:, :2 * Hp].add(b_h[:, :2 * Hp])      # fold b_hr, b_hz into the GI bias
    b_hn = b_h[:, 2 * Hp:3 * Hp]                        # (1, Hp): must stay inside r*(...)

    return dict(emb=emb_table.astype(jnp.bfloat16),     # gather from the UNPADDED table
                w_ih_t=w_ih_t, w_hh_t=w_hh_t, b_gi=b_gi, b_hn=b_hn,
                E=E, H=H, Ep=Ep, Hp=Hp)


# --------------------------------------------------------------------------------------
# Fused kernel wrapper
# --------------------------------------------------------------------------------------
def rnn_encoder_forward(x_ids, params):
    """x_ids: (B, T) int32 token ids. Returns (B, H) f32, L2-normalized along dim 1."""
    B, T = x_ids.shape
    E, H = params["E"], params["H"]
    Ep, Hp = params["Ep"], params["Hp"]

    Bp = _round_up(B, 8)                                # sublanes
    num_b = 1
    if _num_tensorcores() >= 2 and Bp >= 16 and (Bp // 2) % 8 == 0:
        num_b = 2
    Bb = Bp // num_b

    # ---- T-chunk sizing: amortize ~600-cycle/grid-step overhead within a VMEM budget --
    bytes_resident = (2 * (Ep * 3 * Hp * 2 + Hp * 3 * Hp * 2)    # W_ih^T, W_hh^T (x2 buf)
                      + 2 * Bb * Hp * 4 + 4 * 3 * Hp * 4)        # output + biases
    bytes_per_step = Bb * (2 * Ep * 2 + 3 * Hp * 4)              # 2x bf16 x-buf + f32 GI
    budget = 40 * 1024 * 1024                                    # fits v7x (64 MiB) too
    T_CHUNK = int(max(1, min(T, (budget - bytes_resident) // max(bytes_per_step, 1))))
    Tp = _round_up(T, T_CHUNK)
    n_chunks = Tp // T_CHUNK
    needs_mask = (Tp != T)
    vmem_limit = int(min(max(bytes_resident + T_CHUNK * bytes_per_step + (4 << 20),
                             32 << 20), 56 << 20))
    # TODO(synk): for very large E/H (resident W_ih^T alone > ~48 MiB on v7x) add a K/N
    # grid split with an f32 VMEM accumulator instead of holding the full weight resident.

    # ---- glue: embedding gather (cheap int32 transpose; f32/bf16 table untouched) -----
    # TODO(synk): the data-dependent row gather stays in plain JAX (no rectangular
    # BlockSpec equivalent without a scalar-prefetch DMA-per-row kernel).
    ids_tb = jnp.zeros((Tp, Bp), jnp.int32).at[:T, :B].set(
        jnp.transpose(x_ids).astype(jnp.int32))
    x_emb = jnp.take(params["emb"], ids_tb, axis=0)              # (Tp, Bp, E) bf16
    if Ep != E:
        x_emb = jnp.pad(x_emb, ((0, 0), (0, 0), (0, Ep - E)))
    # Re-layout so each (batch_block, chunk) grid step reads one contiguous slab.
    x_emb = (x_emb.reshape(Tp, num_b, Bb, Ep)
                  .transpose(1, 0, 2, 3)
                  .reshape(num_b, Tp * Bb, Ep))                  # (num_b, Tp*Bb, Ep)

    def gru_chunk_kernel(x_ref, wih_ref, whh_ref, bgi_ref, bhn_ref, o_ref, gi_ref, h_ref):
        tc = pl.program_id(1)

        @pl.when(tc == 0)
        def _():
            h_ref[...] = jnp.zeros_like(h_ref)

        # Chunk prologue: ONE MXU matmul for this chunk's whole input projection.
        # GI lives in VMEM scratch (f32) -- it never round-trips HBM.
        gi_ref[...] = jnp.dot(x_ref[...], wih_ref[...],
                              preferred_element_type=jnp.float32) + bgi_ref[...]

        # Hoist the (1,Hp)->(Bb,Hp) broadcast out of the time loop (JAX won't CSE it).
        bhn = jnp.broadcast_to(bhn_ref[...], (Bb, Hp))

        def step(i, h):
            row = pl.multiple_of(i * Bb, Bb)
            h_bf = h.astype(whh_ref.dtype)
            # Consume gates one Hp-wide slab at a time -> peak live data ~Hp wide.
            gh_r = jnp.dot(h_bf, whh_ref[:, 0:Hp], preferred_element_type=jnp.float32)
            r = jax.nn.sigmoid(gi_ref[pl.ds(row, Bb), 0:Hp] + gh_r)
            gh_z = jnp.dot(h_bf, whh_ref[:, Hp:2 * Hp], preferred_element_type=jnp.float32)
            z = jax.nn.sigmoid(gi_ref[pl.ds(row, Bb), Hp:2 * Hp] + gh_z)
            gh_n = jnp.dot(h_bf, whh_ref[:, 2 * Hp:3 * Hp], preferred_element_type=jnp.float32)
            n = jnp.tanh(gi_ref[pl.ds(row, Bb), 2 * Hp:3 * Hp] + r * (gh_n + bhn))
            h_new = (1.0 - z) * n + z * h
            if needs_mask:
                valid = (tc * T_CHUNK + i) < T          # skip padded timesteps
                h_new = jnp.where(valid, h_new, h)
            return h_new

        h_final = lax.fori_loop(0, T_CHUNK, step, h_ref[...], unroll=min(8, T_CHUNK))
        h_ref[...] = h_final

        @pl.when(tc == pl.num_programs(1) - 1)
        def _():
            # F.normalize(p=2, dim=1): x / max(||x||, 1e-12), via rsqrt (EUP slot).
            sq = jnp.sum(h_final * h_final, axis=1, keepdims=True)
            inv = jnp.minimum(lax.rsqrt(sq), 1e12)
            o_ref[...] = (h_final * inv).astype(o_ref.dtype)

    out_p = pl.pallas_call(
        gru_chunk_kernel,
        out_shape=jax.ShapeDtypeStruct((Bp, Hp), jnp.float32),
        grid_spec=pltpu.PrefetchScalarGridSpec(
            num_scalar_prefetch=0,
            grid=(num_b, n_chunks),                      # chunk (time) axis innermost
            in_specs=[
                pl.BlockSpec((None, T_CHUNK * Bb, Ep), lambda b, c: (b, c, 0)),
                pl.BlockSpec((Ep, 3 * Hp), lambda b, c: (0, 0)),
                pl.BlockSpec((Hp, 3 * Hp), lambda b, c: (0, 0)),
                pl.BlockSpec((1, 3 * Hp), lambda b, c: (0, 0)),
                pl.BlockSpec((1, Hp), lambda b, c: (0, 0)),
            ],
            out_specs=pl.BlockSpec((Bb, Hp), lambda b, c: (b, 0)),
            scratch_shapes=[
                pltpu.VMEM((T_CHUNK * Bb, 3 * Hp), jnp.float32),  # GI chunk (on-chip only)
                pltpu.VMEM((Bb, Hp), jnp.float32),                # hidden state
            ],
        ),
        compiler_params=pltpu.CompilerParams(
            dimension_semantics=("parallel", "arbitrary"),
            vmem_limit_bytes=vmem_limit,
        ),
    )(x_emb, params["w_ih_t"], params["w_hh_t"], params["b_gi"], params["b_hn"])

    return out_p[:B, :H]


# --------------------------------------------------------------------------------------
# Pure-JAX reference (f32) mirroring torch nn.GRU + F.normalize
# --------------------------------------------------------------------------------------
def rnn_encoder_reference(x_ids, emb, w_ih, w_hh, b_ih, b_hh):
    B, T = x_ids.shape
    H = w_hh.shape[1]
    x = jnp.take(emb, x_ids, axis=0)                            # (B, T, E)
    h = jnp.zeros((B, H), jnp.float32)
    for t in range(T):
        xt = x[:, t, :]
        gi = xt @ w_ih.T + b_ih
        gh = h @ w_hh.T + b_hh
        r = jax.nn.sigmoid(gi[:, :H] + gh[:, :H])
        z = jax.nn.sigmoid(gi[:, H:2 * H] + gh[:, H:2 * H])
        n = jnp.tanh(gi[:, 2 * H:] + r * gh[:, 2 * H:])
        h = (1.0 - z) * n + z * h
    norm = jnp.maximum(jnp.linalg.norm(h, axis=1, keepdims=True), 1e-12)
    return h / norm


def init_params(key, vocab_size, embed_dim, hidden_dim):
    k_emb, k_wih, k_whh, k_bih, k_bhh = jax.random.split(key, 5)
    emb = jax.random.normal(k_emb, (vocab_size, embed_dim), dtype=jnp.float32)
    emb = emb.at[0].set(0.0)  # padding_idx=0
    bound = 1.0 / jnp.sqrt(jnp.float32(hidden_dim))
    w_ih = jax.random.uniform(k_wih, (3 * hidden_dim, embed_dim),
                              minval=-bound, maxval=bound, dtype=jnp.float32)
    w_hh = jax.random.uniform(k_whh, (3 * hidden_dim, hidden_dim),
                              minval=-bound, maxval=bound, dtype=jnp.float32)
    b_ih = jax.random.uniform(k_bih, (3 * hidden_dim,),
                              minval=-bound, maxval=bound, dtype=jnp.float32)
    b_hh = jax.random.uniform(k_bhh, (3 * hidden_dim,),
                              minval=-bound, maxval=bound, dtype=jnp.float32)
    return emb, w_ih, w_hh, b_ih, b_hh


if __name__ == "__main__":
    vocab_size, embed_dim, hidden_dim = 50, 16, 32
    B, T = 2, 8

    key = jax.random.PRNGKey(0)
    k_params, k_ids = jax.random.split(key)
    emb, w_ih, w_hh, b_ih, b_hh = init_params(k_params, vocab_size, embed_dim, hidden_dim)
    x_ids = jax.random.randint(k_ids, (B, T), 0, vocab_size, dtype=jnp.int32)

    params = prepare_params(emb, w_ih, w_hh, b_ih, b_hh)        # one-time padding
    out = rnn_encoder_forward(x_ids, params)
    out = jax.block_until_ready(out)

    assert out.shape == (B, hidden_dim)
    norms = jnp.linalg.norm(out, axis=1)
    assert jnp.all(jnp.abs(norms - 1.0) < 1e-4)

    ref = rnn_encoder_reference(x_ids, emb, w_ih, w_hh, b_ih, b_hh)
    assert jnp.max(jnp.abs(out - ref)) < 5e-2  # bf16 matmul operands, f32 accumulation

    print("KERNEL_OK")
</pallas_src>

<mosaic_0001>
module attributes {stable_mosaic.version = 11 : i64} {
  func.func @gru_chunk_kernel(%arg0: i32, %arg1: i32, %arg2: memref<1x64x128xbf16, #tpu.memory_space<vmem>>, %arg3: memref<128x384xbf16, #tpu.memory_space<vmem>>, %arg4: memref<128x384xbf16, #tpu.memory_space<vmem>>, %arg5: memref<1x384xf32, #tpu.memory_space<vmem>>, %arg6: memref<1x128xf32, #tpu.memory_space<vmem>>, %arg7: memref<8x128xf32, #tpu.memory_space<vmem>>, %arg8: memref<64x384xf32, #tpu.memory_space<vmem>>, %arg9: memref<8x128xf32, #tpu.memory_space<vmem>>) attributes {dimension_semantics = [#tpu.dimension_semantics<parallel>, #tpu.dimension_semantics<arbitrary>], iteration_bounds = array<i64: 1, 1>, scalar_prefetch = 0 : i64, scratch_operands = 2 : i64, tpu.core_type = #tpu.core_type<tc>, window_params = [{transform_indices = @transform_0, window_bounds = array<i64: 1, 64, 128>}, {pipeline_mode = #tpu.pipeline_mode<synchronous>, transform_indices = @transform_1, window_bounds = array<i64: 128, 384>}, {pipeline_mode = #tpu.pipeline_mode<synchronous>, transform_indices = @transform_2, window_bounds = array<i64: 128, 384>}, {pipeline_mode = #tpu.pipeline_mode<synchronous>, transform_indices = @transform_3, window_bounds = array<i64: 1, 384>}, {pipeline_mode = #tpu.pipeline_mode<synchronous>, transform_indices = @transform_4, window_bounds = array<i64: 1, 128>}, {transform_indices = @transform_5, window_bounds = array<i64: 8, 128>}]} {
    %c0_i32 = arith.constant 0 : i32
    %0 = arith.cmpi eq, %arg1, %c0_i32 : i32
    %1 = arith.extui %0 : i1 to i32
    %c0_i32_0 = arith.constant 0 : i32
    %2 = arith.cmpi ne, %1, %c0_i32_0 : i32
    scf.if %2 {
      %cst_144 = arith.constant 0.000000e+00 : f32
      %307 = vector.broadcast %cst_144 : f32 to vector<8x128xf32>
      %c0_145 = arith.constant 0 : index
      %c0_146 = arith.constant 0 : index
      %308 = vector.load %arg9[%c0_145, %c0_146] : memref<8x128xf32, #tpu.memory_space<vmem>>, vector<8x128xf32>
      tpu.vector_store %arg9[%c0_145, %c0_146], %307 {strides = array<i32>} : memref<8x128xf32, #tpu.memory_space<vmem>>, vector<8x128xf32>,
    } else {
    }
    %c0 = arith.constant 0 : index
    %c0_1 = arith.constant 0 : index
    %c0_2 = arith.constant 0 : index
    %3 = vector.load %arg2[%c0, %c0_1, %c0_2] : memref<1x64x128xbf16, #tpu.memory_space<vmem>>, vector<1x64x128xbf16>
    %4 = vector.shape_cast %3 : vector<1x64x128xbf16> to vector<64x128xbf16>
    %c0_3 = arith.constant 0 : index
    %c0_4 = arith.constant 0 : index
    %5 = vector.load %arg3[%c0_3, %c0_4] : memref<128x384xbf16, #tpu.memory_space<vmem>>, vector<128x384xbf16>
    %cst = arith.constant dense<0.000000e+00> : vector<64x384xf32>
    %6 = tpu.matmul %4, %5, %cst {dimension_numbers = #tpu.dot_dimension_numbers<[1], [0], [0], [1], [0, 0, 1, 1], [], []>} : vector<64x128xbf16>, vector<128x384xbf16>, vector<64x384xf32> -> vector<64x384xf32>
    %c0_5 = arith.constant 0 : index
    %c0_6 = arith.constant 0 : index
    %7 = vector.load %arg5[%c0_5, %c0_6] : memref<1x384xf32, #tpu.memory_space<vmem>>, vector<1x384xf32>
    %8 = vector.broadcast %7 : vector<1x384xf32> to vector<64x384xf32>
    %9 = arith.addf %6, %8 : vector<64x384xf32>
    %c0_7 = arith.constant 0 : index
    %c0_8 = arith.constant 0 : index
    %10 = vector.load %arg8[%c0_7, %c0_8] : memref<64x384xf32, #tpu.memory_space<vmem>>, vector<64x384xf32>
    tpu.vector_store %arg8[%c0_7, %c0_8], %9 {strides = array<i32>} : memref<64x384xf32, #tpu.memory_space<vmem>>, vector<64x384xf32>,
    %c0_9 = arith.constant 0 : index
    %c0_10 = arith.constant 0 : index
    %11 = vector.load %arg6[%c0_9, %c0_10] : memref<1x128xf32, #tpu.memory_space<vmem>>, vector<1x128xf32>
    %12 = vector.shape_cast %11 : vector<1x128xf32> to vector<1x128xf32>
    %13 = vector.broadcast %12 : vector<1x128xf32> to vector<8x128xf32>
    %c0_11 = arith.constant 0 : index
    %c0_12 = arith.constant 0 : index
    %14 = vector.load %arg9[%c0_11, %c0_12] : memref<8x128xf32, #tpu.memory_space<vmem>>, vector<8x128xf32>
    %c0_i32_13 = arith.constant 0 : i32
    %c8_i32 = arith.constant 8 : i32
    %15 = arith.muli %c0_i32_13, %c8_i32 : i32
    %16 = tpu.assume_multiple %15, 8 : i32
    %17 = arith.truncf %14 : vector<8x128xf32> to vector<8x128xbf16>
    %c0_14 = arith.constant 0 : index
    %c0_15 = arith.constant 0 : index
    %18 = vector.load %arg4[%c0_14, %c0_15] : memref<128x384xbf16, #tpu.memory_space<vmem>>, vector<128x128xbf16>
    %cst_16 = arith.constant dense<0.000000e+00> : vector<8x128xf32>
    %19 = tpu.matmul %17, %18, %cst_16 {dimension_numbers = #tpu.dot_dimension_numbers<[1], [0], [0], [1], [0, 0, 1, 1], [], []>} : vector<8x128xbf16>, vector<128x128xbf16>, vector<8x128xf32> -> vector<8x128xf32>
    %20 = arith.index_cast %16 : i32 to index
    %c0_17 = arith.constant 0 : index
    %21 = vector.load %arg8[%20, %c0_17] : memref<64x384xf32, #tpu.memory_space<vmem>>, vector<8x128xf32>
    %22 = arith.addf %21, %19 : vector<8x128xf32>
    %23 = arith.negf %22 : vector<8x128xf32>
    %24 = math.exp %23 : vector<8x128xf32>
    %cst_18 = arith.constant 1.000000e+00 : f32
    %25 = vector.broadcast %cst_18 : f32 to vector<8x128xf32>
    %26 = arith.addf %25, %24 : vector<8x128xf32>
    %27 = arith.divf %25, %26 : vector<8x128xf32>
    %c0_19 = arith.constant 0 : index
    %c128 = arith.constant 128 : index
    %28 = vector.load %arg4[%c0_19, %c128] : memref<128x384xbf16, #tpu.memory_space<vmem>>, vector<128x128xbf16>
    %cst_20 = arith.constant dense<0.000000e+00> : vector<8x128xf32>
    %29 = tpu.matmul %17, %28, %cst_20 {dimension_numbers = #tpu.dot_dimension_numbers<[1], [0], [0], [1], [0, 0, 1, 1], [], []>} : vector<8x128xbf16>, vector<128x128xbf16>, vector<8x128xf32> -> vector<8x128xf32>
    %30 = arith.index_cast %16 : i32 to index
    %c128_21 = arith.constant 128 : index
    %31 = vector.load %arg8[%30, %c128_21] : memref<64x384xf32, #tpu.memory_space<vmem>>, vector<8x128xf32>
    %32 = arith.addf %31, %29 : vector<8x128xf32>
    %33 = arith.negf %32 : vector<8x128xf32>
    %34 = math.exp %33 : vector<8x128xf32>
    %cst_22 = arith.constant 1.000000e+00 : f32
    %35 = vector.broadcast %cst_22 : f32 to vector<8x128xf32>
    %36 = arith.addf %35, %34 : vector<8x128xf32>
    %37 = arith.divf %35, %36 : vector<8x128xf32>
    %c0_23 = arith.constant 0 : index
    %c256 = arith.constant 256 : index
    %38 = vector.load %arg4[%c0_23, %c256] : memref<128x384xbf16, #tpu.memory_space<vmem>>, vector<128x128xbf16>
    %cst_24 = arith.constant dense<0.000000e+00> : vector<8x128xf32>
    %39 = tpu.matmul %17, %38, %cst_24 {dimension_numbers = #tpu.dot_dimension_numbers<[1], [0], [0], [1], [0, 0, 1, 1], [], []>} : vector<8x128xbf16>, vector<128x128xbf16>, vector<8x128xf32> -> vector<8x128xf32>
    %40 = arith.index_cast %16 : i32 to index
    %c256_25 = arith.constant 256 : index
    %41 = vector.load %arg8[%40, %c256_25] : memref<64x384xf32, #tpu.memory_space<vmem>>, vector<8x128xf32>
    %42 = arith.addf %39, %13 : vector<8x128xf32>
    %43 = arith.mulf %27, %42 : vector<8x128xf32>
    %44 = arith.addf %41, %43 : vector<8x128xf32>
    %45 = math.tanh %44 : vector<8x128xf32>
    %cst_26 = arith.constant 1.000000e+00 : f32
    %46 = vector.broadcast %cst_26 : f32 to vector<8x128xf32>
    %47 = arith.subf %46, %37 : vector<8x128xf32>
    %48 = arith.mulf %47, %45 : vector<8x128xf32>
    %49 = arith.mulf %37, %14 : vector<8x128xf32>
    %50 = arith.addf %48, %49 : vector<8x128xf32>
    %c1_i32 = arith.constant 1 : i32
    %c8_i32_27 = arith.constant 8 : i32
    %51 = arith.muli %c1_i32, %c8_i32_27 : i32
    %52 = tpu.assume_multiple %51, 8 : i32
    %53 = arith.truncf %50 : vector<8x128xf32> to vector<8x128xbf16>
    %c0_28 = arith.constant 0 : index
    %c0_29 = arith.constant 0 : index
    %54 = vector.load %arg4[%c0_28, %c0_29] : memref<128x384xbf16, #tpu.memory_space<vmem>>, vector<128x128xbf16>
    %cst_30 = arith.constant dense<0.000000e+00> : vector<8x128xf32>
    %55 = tpu.matmul %53, %54, %cst_30 {dimension_numbers = #tpu.dot_dimension_numbers<[1], [0], [0], [1], [0, 0, 1, 1], [], []>} : vector<8x128xbf16>, vector<128x128xbf16>, vector<8x128xf32> -> vector<8x128xf32>
    %56 = arith.index_cast %52 : i32 to index
    %c0_31 = arith.constant 0 : index
    %57 = vector.load %arg8[%56, %c0_31] : memref<64x384xf32, #tpu.memory_space<vmem>>, vector<8x128xf32>
    %58 = arith.addf %57, %55 : vector<8x128xf32>
    %59 = arith.negf %58 : vector<8x128xf32>
    %60 = math.exp %59 : vector<8x128xf32>
    %cst_32 = arith.constant 1.000000e+00 : f32
    %61 = vector.broadcast %cst_32 : f32 to vector<8x128xf32>
    %62 = arith.addf %61, %60 : vector<8x128xf32>
    %63 = arith.divf %61, %62 : vector<8x128xf32>
    %c0_33 = arith.constant 0 : index
    %c128_34 = arith.constant 128 : index
    %64 = vector.load %arg4[%c0_33, %c128_34] : memref<128x384xbf16, #tpu.memory_space<vmem>>, vector<128x128xbf16>
    %cst_35 = arith.constant dense<0.000000e+00> : vector<8x128xf32>
    %65 = tpu.matmul %53, %64, %cst_35 {dimension_numbers = #tpu.dot_dimension_numbers<[1], [0], [0], [1], [0, 0, 1, 1], [], []>} : vector<8x128xbf16>, vector<128x128xbf16>, vector<8x128xf32> -> vector<8x128xf32>
    %66 = arith.index_cast %52 : i32 to index
    %c128_36 = arith.constant 128 : index
    %67 = vector.load %arg8[%66, %c128_36] : memref<64x384xf32, #tpu.memory_space<vmem>>, vector<8x128xf32>
    %68 = arith.addf %67, %65 : vector<8x128xf32>
    %69 = arith.negf %68 : vector<8x128xf32>
    %70 = math.exp %69 : vector<8x128xf32>
    %cst_37 = arith.constant 1.000000e+00 : f32
    %71 = vector.broadcast %cst_37 : f32 to vector<8x128xf32>
    %72 = arith.addf %71, %70 : vector<8x128xf32>
    %73 = arith.divf %71, %72 : vector<8x128xf32>
    %c0_38 = arith.constant 0 : index
    %c256_39 = arith.constant 256 : index
    %74 = vector.load %arg4[%c0_38, %c256_39] : memref<128x384xbf16, #tpu.memory_space<vmem>>, vector<128x128xbf16>
    %cst_40 = arith.constant dense<0.000000e+00> : vector<8x128xf32>
    %75 = tpu.matmul %53, %74, %cst_40 {dimension_numbers = #tpu.dot_dimension_numbers<[1], [0], [0], [1], [0, 0, 1, 1], [], []>} : vector<8x128xbf16>, vector<128x128xbf16>, vector<8x128xf32> -> vector<8x128xf32>
    %76 = arith.index_cast %52 : i32 to index
    %c256_41 = arith.constant 256 : index
    %77 = vector.load %arg8[%76, %c256_41] : memref<64x384xf32, #tpu.memory_space<vmem>>, vector<8x128xf32>
    %78 = arith.addf %75, %13 : vector<8x128xf32>
    %79 = arith.mulf %63, %78 : vector<8x128xf32>
    %80 = arith.addf %77, %79 : vector<8x128xf32>
    %81 = math.tanh %80 : vector<8x128xf32>
    %cst_42 = arith.constant 1.000000e+00 : f32
    %82 = vector.broadcast %cst_42 : f32 to vector<8x128xf32>
    %83 = arith.subf %82, %73 : vector<8x128xf32>
    %84 = arith.mulf %83, %81 : vector<8x128xf32>
    %85 = arith.mulf %73, %50 : vector<8x128xf32>
    %86 = arith.addf %84, %85 : vector<8x128xf32>
    %c2_i32 = arith.constant 2 : i32
    %c8_i32_43 = arith.constant 8 : i32
    %87 = arith.muli %c2_i32, %c8_i32_43 : i32
    %88 = tpu.assume_multiple %87, 8 : i32
    %89 = arith.truncf %86 : vector<8x128xf32> to vector<8x128xbf16>
    %c0_44 = arith.constant 0 : index
    %c0_45 = arith.constant 0 : index
    %90 = vector.load %arg4[%c0_44, %c0_45] : memref<128x384xbf16, #tpu.memory_space<vmem>>, vector<128x128xbf16>
    %cst_46 = arith.constant dense<0.000000e+00> : vector<8x128xf32>
    %91 = tpu.matmul %89, %90, %cst_46 {dimension_numbers = #tpu.dot_dimension_numbers<[1], [0], [0], [1], [0, 0, 1, 1], [], []>} : vector<8x128xbf16>, vector<128x128xbf16>, vector<8x128xf32> -> vector<8x128xf32>
    %92 = arith.index_cast %88 : i32 to index
    %c0_47 = arith.constant 0 : index
    %93 = vector.load %arg8[%92, %c0_47] : memref<64x384xf32, #tpu.memory_space<vmem>>, vector<8x128xf32>
    %94 = arith.addf %93, %91 : vector<8x128xf32>
    %95 = arith.negf %94 : vector<8x128xf32>
    %96 = math.exp %95 : vector<8x128xf32>
    %cst_48 = arith.constant 1.000000e+00 : f32
    %97 = vector.broadcast %cst_48 : f32 to vector<8x128xf32>
    %98 = arith.addf %97, %96 : vector<8x128xf32>
    %99 = arith.divf %97, %98 : vector<8x128xf32>
    %c0_49 = arith.constant 0 : index
    %c128_50 = arith.constant 128 : index
    %100 = vector.load %arg4[%c0_49, %c128_50] : memref<128x384xbf16, #tpu.memory_space<vmem>>, vector<128x128xbf16>
    %cst_51 = arith.constant dense<0.000000e+00> : vector<8x128xf32>
    %101 = tpu.matmul %89, %100, %cst_51 {dimension_numbers = #tpu.dot_dimension_numbers<[1], [0], [0], [1], [0, 0, 1, 1], [], []>} : vector<8x128xbf16>, vector<128x128xbf16>, vector<8x128xf32> -> vector<8x128xf32>
    %102 = arith.index_cast %88 : i32 to index
    %c128_52 = arith.constant 128 : index
    %103 = vector.load %arg8[%102, %c128_52] : memref<64x384xf32, #tpu.memory_space<vmem>>, vector<8x128xf32>
    %104 = arith.addf %103, %101 : vector<8x128xf32>
    %105 = arith.negf %104 : vector<8x128xf32>
    %106 = math.exp %105 : vector<8x128xf32>
    %cst_53 = arith.constant 1.000000e+00 : f32
    %107 = vector.broadcast %cst_53 : f32 to vector<8x128xf32>
    %108 = arith.addf %107, %106 : vector<8x128xf32>
    %109 = arith.divf %107, %108 : vector<8x128xf32>
    %c0_54 = arith.constant 0 : index
    %c256_55 = arith.constant 256 : index
    %110 = vector.load %arg4[%c0_54, %c256_55] : memref<128x384xbf16, #tpu.memory_space<vmem>>, vector<128x128xbf16>
    %cst_56 = arith.constant dense<0.000000e+00> : vector<8x128xf32>
    %111 = tpu.matmul %89, %110, %cst_56 {dimension_numbers = #tpu.dot_dimension_numbers<[1], [0], [0], [1], [0, 0, 1, 1], [], []>} : vector<8x128xbf16>, vector<128x128xbf16>, vector<8x128xf32> -> vector<8x128xf32>
    %112 = arith.index_cast %88 : i32 to index
    %c256_57 = arith.constant 256 : index
    %113 = vector.load %arg8[%112, %c256_57] : memref<64x384xf32, #tpu.memory_space<vmem>>, vector<8x128xf32>
    %114 = arith.addf %111, %13 : vector<8x128xf32>
    %115 = arith.mulf %99, %114 : vector<8x128xf32>
    %116 = arith.addf %113, %115 : vector<8x128xf32>
    %117 = math.tanh %116 : vector<8x128xf32>
    %cst_58 = arith.constant 1.000000e+00 : f32
    %118 = vector.broadcast %cst_58 : f32 to vector<8x128xf32>
    %119 = arith.subf %118, %109 : vector<8x128xf32>
    %120 = arith.mulf %119, %117 : vector<8x128xf32>
    %121 = arith.mulf %109, %86 : vector<8x128xf32>
    %122 = arith.addf %120, %121 : vector<8x128xf32>
    %c3_i32 = arith.constant 3 : i32
    %c8_i32_59 = arith.constant 8 : i32
    %123 = arith.muli %c3_i32, %c8_i32_59 : i32
    %124 = tpu.assume_multiple %123, 8 : i32
    %125 = arith.truncf %122 : vector<8x128xf32> to vector<8x128xbf16>
    %c0_60 = arith.constant 0 : index
    %c0_61 = arith.constant 0 : index
    %126 = vector.load %arg4[%c0_60, %c0_61] : memref<128x384xbf16, #tpu.memory_space<vmem>>, vector<128x128xbf16>
    %cst_62 = arith.constant dense<0.000000e+00> : vector<8x128xf32>
    %127 = tpu.matmul %125, %126, %cst_62 {dimension_numbers = #tpu.dot_dimension_numbers<[1], [0], [0], [1], [0, 0, 1, 1], [], []>} : vector<8x128xbf16>, vector<128x128xbf16>, vector<8x128xf32> -> vector<8x128xf32>
    %128 = arith.index_cast %124 : i32 to index
    %c0_63 = arith.constant 0 : index
    %129 = vector.load %arg8[%128, %c0_63] : memref<64x384xf32, #tpu.memory_space<vmem>>, vector<8x128xf32>
    %130 = arith.addf %129, %127 : vector<8x128xf32>
    %131 = arith.negf %130 : vector<8x128xf32>
    %132 = math.exp %131 : vector<8x128xf32>
    %cst_64 = arith.constant 1.000000e+00 : f32
    %133 = vector.broadcast %cst_64 : f32 to vector<8x128xf32>
    %134 = arith.addf %133, %132 : vector<8x128xf32>
    %135 = arith.divf %133, %134 : vector<8x128xf32>
    %c0_65 = arith.constant 0 : index
    %c128_66 = arith.constant 128 : index
    %136 = vector.load %arg4[%c0_65, %c128_66] : memref<128x384xbf16, #tpu.memory_space<vmem>>, vector<128x128xbf16>
    %cst_67 = arith.constant dense<0.000000e+00> : vector<8x128xf32>
    %137 = tpu.matmul %125, %136, %cst_67 {dimension_numbers = #tpu.dot_dimension_numbers<[1], [0], [0], [1], [0, 0, 1, 1], [], []>} : vector<8x128xbf16>, vector<128x128xbf16>, vector<8x128xf32> -> vector<8x128xf32>
    %138 = arith.index_cast %124 : i32 to index
    %c128_68 = arith.constant 128 : index
    %139 = vector.load %arg8[%138, %c128_68] : memref<64x384xf32, #tpu.memory_space<vmem>>, vector<8x128xf32>
    %140 = arith.addf %139, %137 : vector<8x128xf32>
    %141 = arith.negf %140 : vector<8x128xf32>
    %142 = math.exp %141 : vector<8x128xf32>
    %cst_69 = arith.constant 1.000000e+00 : f32
    %143 = vector.broadcast %cst_69 : f32 to vector<8x128xf32>
    %144 = arith.addf %143, %142 : vector<8x128xf32>
    %145 = arith.divf %143, %144 : vector<8x128xf32>
    %c0_70 = arith.constant 0 : index
    %c256_71 = arith.constant 256 : index
    %146 = vector.load %arg4[%c0_70, %c256_71] : memref<128x384xbf16, #tpu.memory_space<vmem>>, vector<128x128xbf16>
    %cst_72 = arith.constant dense<0.000000e+00> : vector<8x128xf32>
    %147 = tpu.matmul %125, %146, %cst_72 {dimension_numbers = #tpu.dot_dimension_numbers<[1], [0], [0], [1], [0, 0, 1, 1], [], []>} : vector<8x128xbf16>, vector<128x128xbf16>, vector<8x128xf32> -> vector<8x128xf32>
    %148 = arith.index_cast %124 : i32 to index
    %c256_73 = arith.constant 256 : index
    %149 = vector.load %arg8[%148, %c256_73] : memref<64x384xf32, #tpu.memory_space<vmem>>, vector<8x128xf32>
    %150 = arith.addf %147, %13 : vector<8x128xf32>
    %151 = arith.mulf %135, %150 : vector<8x128xf32>
    %152 = arith.addf %149, %151 : vector<8x128xf32>
    %153 = math.tanh %152 : vector<8x128xf32>
    %cst_74 = arith.constant 1.000000e+00 : f32
    %154 = vector.broadcast %cst_74 : f32 to vector<8x128xf32>
    %155 = arith.subf %154, %145 : vector<8x128xf32>
    %156 = arith.mulf %155, %153 : vector<8x128xf32>
    %157 = arith.mulf %145, %122 : vector<8x128xf32>
    %158 = arith.addf %156, %157 : vector<8x128xf32>
    %c4_i32 = arith.constant 4 : i32
    %c8_i32_75 = arith.constant 8 : i32
    %159 = arith.muli %c4_i32, %c8_i32_75 : i32
    %160 = tpu.assume_multiple %159, 8 : i32
    %161 = arith.truncf %158 : vector<8x128xf32> to vector<8x128xbf16>
    %c0_76 = arith.constant 0 : index
    %c0_77 = arith.constant 0 : index
    %162 = vector.load %arg4[%c0_76, %c0_77] : memref<128x384xbf16, #tpu.memory_space<vmem>>, vector<128x128xbf16>
    %cst_78 = arith.constant dense<0.000000e+00> : vector<8x128xf32>
    %163 = tpu.matmul %161, %162, %cst_78 {dimension_numbers = #tpu.dot_dimension_numbers<[1], [0], [0], [1], [0, 0, 1, 1], [], []>} : vector<8x128xbf16>, vector<128x128xbf16>, vector<8x128xf32> -> vector<8x128xf32>
    %164 = arith.index_cast %160 : i32 to index
    %c0_79 = arith.constant 0 : index
    %165 = vector.load %arg8[%164, %c0_79] : memref<64x384xf32, #tpu.memory_space<vmem>>, vector<8x128xf32>
    %166 = arith.addf %165, %163 : vector<8x128xf32>
    %167 = arith.negf %166 : vector<8x128xf32>
    %168 = math.exp %167 : vector<8x128xf32>
    %cst_80 = arith.constant 1.000000e+00 : f32
    %169 = vector.broadcast %cst_80 : f32 to vector<8x128xf32>
    %170 = arith.addf %169, %168 : vector<8x128xf32>
    %171 = arith.divf %169, %170 : vector<8x128xf32>
    %c0_81 = arith.constant 0 : index
    %c128_82 = arith.constant 128 : index
    %172 = vector.load %arg4[%c0_81, %c128_82] : memref<128x384xbf16, #tpu.memory_space<vmem>>, vector<128x128xbf16>
    %cst_83 = arith.constant dense<0.000000e+00> : vector<8x128xf32>
    %173 = tpu.matmul %161, %172, %cst_83 {dimension_numbers = #tpu.dot_dimension_numbers<[1], [0], [0], [1], [0, 0, 1, 1], [], []>} : vector<8x128xbf16>, vector<128x128xbf16>, vector<8x128xf32> -> vector<8x128xf32>
    %174 = arith.index_cast %160 : i32 to index
    %c128_84 = arith.constant 128 : index
    %175 = vector.load %arg8[%174, %c128_84] : memref<64x384xf32, #tpu.memory_space<vmem>>, vector<8x128xf32>
    %176 = arith.addf %175, %173 : vector<8x128xf32>
    %177 = arith.negf %176 : vector<8x128xf32>
    %178 = math.exp %177 : vector<8x128xf32>
    %cst_85 = arith.constant 1.000000e+00 : f32
    %179 = vector.broadcast %cst_85 : f32 to vector<8x128xf32>
    %180 = arith.addf %179, %178 : vector<8x128xf32>
    %181 = arith.divf %179, %180 : vector<8x128xf32>
    %c0_86 = arith.constant 0 : index
    %c256_87 = arith.constant 256 : index
    %182 = vector.load %arg4[%c0_86, %c256_87] : memref<128x384xbf16, #tpu.memory_space<vmem>>, vector<128x128xbf16>
    %cst_88 = arith.constant dense<0.000000e+00> : vector<8x128xf32>
    %183 = tpu.matmul %161, %182, %cst_88 {dimension_numbers = #tpu.dot_dimension_numbers<[1], [0], [0], [1], [0, 0, 1, 1], [], []>} : vector<8x128xbf16>, vector<128x128xbf16>, vector<8x128xf32> -> vector<8x128xf32>
    %184 = arith.index_cast %160 : i32 to index
    %c256_89 = arith.constant 256 : index
    %185 = vector.load %arg8[%184, %c256_89] : memref<64x384xf32, #tpu.memory_space<vmem>>, vector<8x128xf32>
    %186 = arith.addf %183, %13 : vector<8x128xf32>
    %187 = arith.mulf %171, %186 : vector<8x128xf32>
    %188 = arith.addf %185, %187 : vector<8x128xf32>
    %189 = math.tanh %188 : vector<8x128xf32>
    %cst_90 = arith.constant 1.000000e+00 : f32
    %190 = vector.broadcast %cst_90 : f32 to vector<8x128xf32>
    %191 = arith.subf %190, %181 : vector<8x128xf32>
    %192 = arith.mulf %191, %189 : vector<8x128xf32>
    %193 = arith.mulf %181, %158 : vector<8x128xf32>
    %194 = arith.addf %192, %193 : vector<8x128xf32>
    %c5_i32 = arith.constant 5 : i32
    %c8_i32_91 = arith.constant 8 : i32
    %195 = arith.muli %c5_i32, %c8_i32_91 : i32
    %196 = tpu.assume_multiple %195, 8 : i32
    %197 = arith.truncf %194 : vector<8x128xf32> to vector<8x128xbf16>
    %c0_92 = arith.constant 0 : index
    %c0_93 = arith.constant 0 : index
    %198 = vector.load %arg4[%c0_92, %c0_93] : memref<128x384xbf16, #tpu.memory_space<vmem>>, vector<128x128xbf16>
    %cst_94 = arith.constant dense<0.000000e+00> : vector<8x128xf32>
    %199 = tpu.matmul %197, %198, %cst_94 {dimension_numbers = #tpu.dot_dimension_numbers<[1], [0], [0], [1], [0, 0, 1, 1], [], []>} : vector<8x128xbf16>, vector<128x128xbf16>, vector<8x128xf32> -> vector<8x128xf32>
    %200 = arith.index_cast %196 : i32 to index
    %c0_95 = arith.constant 0 : index
    %201 = vector.load %arg8[%200, %c0_95] : memref<64x384xf32, #tpu.memory_space<vmem>>, vector<8x128xf32>
    %202 = arith.addf %201, %199 : vector<8x128xf32>
    %203 = arith.negf %202 : vector<8x128xf32>
    %204 = math.exp %203 : vector<8x128xf32>
    %cst_96 = arith.constant 1.000000e+00 : f32
    %205 = vector.broadcast %cst_96 : f32 to vector<8x128xf32>
    %206 = arith.addf %205, %204 : vector<8x128xf32>
    %207 = arith.divf %205, %206 : vector<8x128xf32>
    %c0_97 = arith.constant 0 : index
    %c128_98 = arith.constant 128 : index
    %208 = vector.load %arg4[%c0_97, %c128_98] : memref<128x384xbf16, #tpu.memory_space<vmem>>, vector<128x128xbf16>
    %cst_99 = arith.constant dense<0.000000e+00> : vector<8x128xf32>
    %209 = tpu.matmul %197, %208, %cst_99 {dimension_numbers = #tpu.dot_dimension_numbers<[1], [0], [0], [1], [0, 0, 1, 1], [], []>} : vector<8x128xbf16>, vector<128x128xbf16>, vector<8x128xf32> -> vector<8x128xf32>
    %210 = arith.index_cast %196 : i32 to index
    %c128_100 = arith.constant 128 : index
    %211 = vector.load %arg8[%210, %c128_100] : memref<64x384xf32, #tpu.memory_space<vmem>>, vector<8x128xf32>
    %212 = arith.addf %211, %209 : vector<8x128xf32>
    %213 = arith.negf %212 : vector<8x128xf32>
    %214 = math.exp %213 : vector<8x128xf32>
    %cst_101 = arith.constant 1.000000e+00 : f32
    %215 = vector.broadcast %cst_101 : f32 to vector<8x128xf32>
    %216 = arith.addf %215, %214 : vector<8x128xf32>
    %217 = arith.divf %215, %216 : vector<8x128xf32>
    %c0_102 = arith.constant 0 : index
    %c256_103 = arith.constant 256 : index
    %218 = vector.load %arg4[%c0_102, %c256_103] : memref<128x384xbf16, #tpu.memory_space<vmem>>, vector<128x128xbf16>
    %cst_104 = arith.constant dense<0.000000e+00> : vector<8x128xf32>
    %219 = tpu.matmul %197, %218, %cst_104 {dimension_numbers = #tpu.dot_dimension_numbers<[1], [0], [0], [1], [0, 0, 1, 1], [], []>} : vector<8x128xbf16>, vector<128x128xbf16>, vector<8x128xf32> -> vector<8x128xf32>
    %220 = arith.index_cast %196 : i32 to index
    %c256_105 = arith.constant 256 : index
    %221 = vector.load %arg8[%220, %c256_105] : memref<64x384xf32, #tpu.memory_space<vmem>>, vector<8x128xf32>
    %222 = arith.addf %219, %13 : vector<8x128xf32>
    %223 = arith.mulf %207, %222 : vector<8x128xf32>
    %224 = arith.addf %221, %223 : vector<8x128xf32>
    %225 = math.tanh %224 : vector<8x128xf32>
    %cst_106 = arith.constant 1.000000e+00 : f32
    %226 = vector.broadcast %cst_106 : f32 to vector<8x128xf32>
    %227 = arith.subf %226, %217 : vector<8x128xf32>
    %228 = arith.mulf %227, %225 : vector<8x128xf32>
    %229 = arith.mulf %217, %194 : vector<8x128xf32>
    %230 = arith.addf %228, %229 : vector<8x128xf32>
    %c6_i32 = arith.constant 6 : i32
    %c8_i32_107 = arith.constant 8 : i32
    %231 = arith.muli %c6_i32, %c8_i32_107 : i32
    %232 = tpu.assume_multiple %231, 8 : i32
    %233 = arith.truncf %230 : vector<8x128xf32> to vector<8x128xbf16>
    %c0_108 = arith.constant 0 : index
    %c0_109 = arith.constant 0 : index
    %234 = vector.load %arg4[%c0_108, %c0_109] : memref<128x384xbf16, #tpu.memory_space<vmem>>, vector<128x128xbf16>
    %cst_110 = arith.constant dense<0.000000e+00> : vector<8x128xf32>
    %235 = tpu.matmul %233, %234, %cst_110 {dimension_numbers = #tpu.dot_dimension_numbers<[1], [0], [0], [1], [0, 0, 1, 1], [], []>} : vector<8x128xbf16>, vector<128x128xbf16>, vector<8x128xf32> -> vector<8x128xf32>
    %236 = arith.index_cast %232 : i32 to index
    %c0_111 = arith.constant 0 : index
    %237 = vector.load %arg8[%236, %c0_111] : memref<64x384xf32, #tpu.memory_space<vmem>>, vector<8x128xf32>
    %238 = arith.addf %237, %235 : vector<8x128xf32>
    %239 = arith.negf %238 : vector<8x128xf32>
    %240 = math.exp %239 : vector<8x128xf32>
    %cst_112 = arith.constant 1.000000e+00 : f32
    %241 = vector.broadcast %cst_112 : f32 to vector<8x128xf32>
    %242 = arith.addf %241, %240 : vector<8x128xf32>
    %243 = arith.divf %241, %242 : vector<8x128xf32>
    %c0_113 = arith.constant 0 : index
    %c128_114 = arith.constant 128 : index
    %244 = vector.load %arg4[%c0_113, %c128_114] : memref<128x384xbf16, #tpu.memory_space<vmem>>, vector<128x128xbf16>
    %cst_115 = arith.constant dense<0.000000e+00> : vector<8x128xf32>
    %245 = tpu.matmul %233, %244, %cst_115 {dimension_numbers = #tpu.dot_dimension_numbers<[1], [0], [0], [1], [0, 0, 1, 1], [], []>} : vector<8x128xbf16>, vector<128x128xbf16>, vector<8x128xf32> -> vector<8x128xf32>
    %246 = arith.index_cast %232 : i32 to index
    %c128_116 = arith.constant 128 : index
    %247 = vector.load %arg8[%246, %c128_116] : memref<64x384xf32, #tpu.memory_space<vmem>>, vector<8x128xf32>
    %248 = arith.addf %247, %245 : vector<8x128xf32>
    %249 = arith.negf %248 : vector<8x128xf32>
    %250 = math.exp %249 : vector<8x128xf32>
    %cst_117 = arith.constant 1.000000e+00 : f32
    %251 = vector.broadcast %cst_117 : f32 to vector<8x128xf32>
    %252 = arith.addf %251, %250 : vector<8x128xf32>
    %253 = arith.divf %251, %252 : vector<8x128xf32>
    %c0_118 = arith.constant 0 : index
    %c256_119 = arith.constant 256 : index
    %254 = vector.load %arg4[%c0_118, %c256_119] : memref<128x384xbf16, #tpu.memory_space<vmem>>, vector<128x128xbf16>
    %cst_120 = arith.constant dense<0.000000e+00> : vector<8x128xf32>
    %255 = tpu.matmul %233, %254, %cst_120 {dimension_numbers = #tpu.dot_dimension_numbers<[1], [0], [0], [1], [0, 0, 1, 1], [], []>} : vector<8x128xbf16>, vector<128x128xbf16>, vector<8x128xf32> -> vector<8x128xf32>
    %256 = arith.index_cast %232 : i32 to index
    %c256_121 = arith.constant 256 : index
    %257 = vector.load %arg8[%256, %c256_121] : memref<64x384xf32, #tpu.memory_space<vmem>>, vector<8x128xf32>
    %258 = arith.addf %255, %13 : vector<8x128xf32>
    %259 = arith.mulf %243, %258 : vector<8x128xf32>
    %260 = arith.addf %257, %259 : vector<8x128xf32>
    %261 = math.tanh %260 : vector<8x128xf32>
    %cst_122 = arith.constant 1.000000e+00 : f32
    %262 = vector.broadcast %cst_122 : f32 to vector<8x128xf32>
    %263 = arith.subf %262, %253 : vector<8x128xf32>
    %264 = arith.mulf %263, %261 : vector<8x128xf32>
    %265 = arith.mulf %253, %230 : vector<8x128xf32>
    %266 = arith.addf %264, %265 : vector<8x128xf32>
    %c7_i32 = arith.constant 7 : i32
    %c8_i32_123 = arith.constant 8 : i32
    %267 = arith.muli %c7_i32, %c8_i32_123 : i32
    %268 = tpu.assume_multiple %267, 8 : i32
    %269 = arith.truncf %266 : vector<8x128xf32> to vector<8x128xbf16>
    %c0_124 = arith.constant 0 : index
    %c0_125 = arith.constant 0 : index
    %270 = vector.load %arg4[%c0_124, %c0_125] : memref<128x384xbf16, #tpu.memory_space<vmem>>, vector<128x128xbf16>
    %cst_126 = arith.constant dense<0.000000e+00> : vector<8x128xf32>
    %271 = tpu.matmul %269, %270, %cst_126 {dimension_numbers = #tpu.dot_dimension_numbers<[1], [0], [0], [1], [0, 0, 1, 1], [], []>} : vector<8x128xbf16>, vector<128x128xbf16>, vector<8x128xf32> -> vector<8x128xf32>
    %272 = arith.index_cast %268 : i32 to index
    %c0_127 = arith.constant 0 : index
    %273 = vector.load %arg8[%272, %c0_127] : memref<64x384xf32, #tpu.memory_space<vmem>>, vector<8x128xf32>
    %274 = arith.addf %273, %271 : vector<8x128xf32>
    %275 = arith.negf %274 : vector<8x128xf32>
    %276 = math.exp %275 : vector<8x128xf32>
    %cst_128 = arith.constant 1.000000e+00 : f32
    %277 = vector.broadcast %cst_128 : f32 to vector<8x128xf32>
    %278 = arith.addf %277, %276 : vector<8x128xf32>
    %279 = arith.divf %277, %278 : vector<8x128xf32>
    %c0_129 = arith.constant 0 : index
    %c128_130 = arith.constant 128 : index
    %280 = vector.load %arg4[%c0_129, %c128_130] : memref<128x384xbf16, #tpu.memory_space<vmem>>, vector<128x128xbf16>
    %cst_131 = arith.constant dense<0.000000e+00> : vector<8x128xf32>
    %281 = tpu.matmul %269, %280, %cst_131 {dimension_numbers = #tpu.dot_dimension_numbers<[1], [0], [0], [1], [0, 0, 1, 1], [], []>} : vector<8x128xbf16>, vector<128x128xbf16>, vector<8x128xf32> -> vector<8x128xf32>
    %282 = arith.index_cast %268 : i32 to index
    %c128_132 = arith.constant 128 : index
    %283 = vector.load %arg8[%282, %c128_132] : memref<64x384xf32, #tpu.memory_space<vmem>>, vector<8x128xf32>
    %284 = arith.addf %283, %281 : vector<8x128xf32>
    %285 = arith.negf %284 : vector<8x128xf32>
    %286 = math.exp %285 : vector<8x128xf32>
    %cst_133 = arith.constant 1.000000e+00 : f32
    %287 = vector.broadcast %cst_133 : f32 to vector<8x128xf32>
    %288 = arith.addf %287, %286 : vector<8x128xf32>
    %289 = arith.divf %287, %288 : vector<8x128xf32>
    %c0_134 = arith.constant 0 : index
    %c256_135 = arith.constant 256 : index
    %290 = vector.load %arg4[%c0_134, %c256_135] : memref<128x384xbf16, #tpu.memory_space<vmem>>, vector<128x128xbf16>
    %cst_136 = arith.constant dense<0.000000e+00> : vector<8x128xf32>
    %291 = tpu.matmul %269, %290, %cst_136 {dimension_numbers = #tpu.dot_dimension_numbers<[1], [0], [0], [1], [0, 0, 1, 1], [], []>} : vector<8x128xbf16>, vector<128x128xbf16>, vector<8x128xf32> -> vector<8x128xf32>
    %292 = arith.index_cast %268 : i32 to index
    %c256_137 = arith.constant 256 : index
    %293 = vector.load %arg8[%292, %c256_137] : memref<64x384xf32, #tpu.memory_space<vmem>>, vector<8x128xf32>
    %294 = arith.addf %291, %13 : vector<8x128xf32>
    %295 = arith.mulf %279, %294 : vector<8x128xf32>
    %296 = arith.addf %293, %295 : vector<8x128xf32>
    %297 = math.tanh %296 : vector<8x128xf32>
    %cst_138 = arith.constant 1.000000e+00 : f32
    %298 = vector.broadcast %cst_138 : f32 to vector<8x128xf32>
    %299 = arith.subf %298, %289 : vector<8x128xf32>
    %300 = arith.mulf %299, %297 : vector<8x128xf32>
    %301 = arith.mulf %289, %266 : vector<8x128xf32>
    %302 = arith.addf %300, %301 : vector<8x128xf32>
    %c8_i32_139 = arith.constant 8 : i32
    %c0_140 = arith.constant 0 : index
    %c0_141 = arith.constant 0 : index
    %303 = vector.load %arg9[%c0_140, %c0_141] : memref<8x128xf32, #tpu.memory_space<vmem>>, vector<8x128xf32>
    tpu.vector_store %arg9[%c0_140, %c0_141], %302 {strides = array<i32>} : memref<8x128xf32, #tpu.memory_space<vmem>>, vector<8x128xf32>,
    %c0_i32_142 = arith.constant 0 : i32
    %304 = arith.cmpi eq, %arg1, %c0_i32_142 : i32
    %305 = arith.extui %304 : i1 to i32
    %c0_i32_143 = arith.constant 0 : i32
    %306 = arith.cmpi ne, %305, %c0_i32_143 : i32
    scf.if %306 {
      %307 = arith.mulf %302, %302 : vector<8x128xf32>
      %cst_144 = arith.constant dense<0.000000e+00> : vector<8xf32>
      %308 = vector.multi_reduction <add>, %307, %cst_144 [1] : vector<8x128xf32> to vector<8xf32>
      %309 = vector.shape_cast %308 : vector<8xf32> to vector<8x1xf32>
      %310 = math.rsqrt %309 : vector<8x1xf32>
      %cst_145 = arith.constant 9.99999995E+11 : f32
      %311 = vector.broadcast %cst_145 : f32 to vector<8x1xf32>
      %312 = arith.minimumf %310, %311 : vector<8x1xf32>
      %313 = vector.broadcast %312 : vector<8x1xf32> to vector<8x128xf32>
      %314 = arith.mulf %302, %313 : vector<8x128xf32>
      %c0_146 = arith.constant 0 : index
      %c0_147 = arith.constant 0 : index
      %315 = vector.load %arg7[%c0_146, %c0_147] : memref<8x128xf32, #tpu.memory_space<vmem>>, vector<8x128xf32>
      tpu.vector_store %arg7[%c0_146, %c0_147], %314 {strides = array<i32>} : memref<8x128xf32, #tpu.memory_space<vmem>>, vector<8x128xf32>,
    } else {
    }
    return
  }
  func.func @transform_0(%arg0: i32, %arg1: i32) -> (i32, i32, i32) {
    %c0_i32 = arith.constant 0 : i32
    %c0_i32_0 = arith.constant 0 : i32
    return %arg0, %arg1, %c0_i32 : i32, i32, i32
  }
  func.func @transform_1(%arg0: i32, %arg1: i32) -> (i32, i32) {
    %c0_i32 = arith.constant 0 : i32
    %c0_i32_0 = arith.constant 0 : i32
    %c0_i32_1 = arith.constant 0 : i32
    return %c0_i32, %c0_i32_0 : i32, i32
  }
  func.func @transform_2(%arg0: i32, %arg1: i32) -> (i32, i32) {
    %c0_i32 = arith.constant 0 : i32
    %c0_i32_0 = arith.constant 0 : i32
    %c0_i32_1 = arith.constant 0 : i32
    return %c0_i32, %c0_i32_0 : i32, i32
  }
  func.func @transform_3(%arg0: i32, %arg1: i32) -> (i32, i32) {
    %c0_i32 = arith.constant 0 : i32
    %c0_i32_0 = arith.constant 0 : i32
    %c0_i32_1 = arith.constant 0 : i32
    return %c0_i32, %c0_i32_0 : i32, i32
  }
  func.func @transform_4(%arg0: i32, %arg1: i32) -> (i32, i32) {
    %c0_i32 = arith.constant 0 : i32
    %c0_i32_0 = arith.constant 0 : i32
    %c0_i32_1 = arith.constant 0 : i32
    return %c0_i32, %c0_i32_0 : i32, i32
  }
  func.func @transform_5(%arg0: i32, %arg1: i32) -> (i32, i32) {
    %c0_i32 = arith.constant 0 : i32
    %c0_i32_0 = arith.constant 0 : i32
    return %arg0, %c0_i32 : i32, i32
  }
}

</mosaic_0001>

<llo_original>
// kernel: tpu_custom_call.1
$region0: #{tpu_custom_call.1}
  #allocation0 [shape = 'u32[]', space=smem, size = 0x4, offset = 0x4, fixed_abs, tag = 'smem constant byte address 0x4 - core index']
  #allocation1 [shape = 'u32[144,128]{1,0:T(1,128)}', space=vmem, size = 0x12000, scoped, tag = 'internal scratch']
  #allocation2 [shape = 'f32[64,384]{1,0:T(8,128)}', space=vmem, size = 0x18000, scoped, tag = 'scratch operand']
  #allocation3 [shape = 'f32[8,128]{1,0:T(8,128)}', space=vmem, size = 0x1000, scoped, tag = 'scratch operand']
  %s0 = inlined_call_operand.hbm [shape: bf16[1,64,128], index: 0, kind: input, shape index: {}]
  %s1 = inlined_call_operand.hbm [shape: bf16[128,384], index: 1, kind: input, shape index: {}]
  %s2 = inlined_call_operand.hbm [shape: bf16[128,384], index: 2, kind: input, shape index: {}]
  %s3 = inlined_call_operand.vmem [shape: f32[1,384], index: 3, kind: input, shape index: {}]
  %s4 = inlined_call_operand.vmem [shape: f32[1,128], index: 4, kind: input, shape index: {}]
  %s5 = inlined_call_operand.hbm [shape: f32[8,128], index: 5, kind: output, shape index: {}]
  %s6 = sld [smem:[#allocation0]]
  $region50: #{tpu_custom_call.1} parent=0
    _
  %s8 = ssub.s32 1, %s6
  %s9 = scalar_select 0, %s8, %s6
  $region1: #{tpu_custom_call.1} parent=0
    #allocation4 [shape = 'u8[16384]{0}', space=vmem, size = 0x4000, scoped, tag = 'input window, operand 0, single buffered']
    #allocation5 [shape = 's32[1]{0}', space=sflag, size = 0x4, scoped, tag = 'scoped memory for tpu_custom_call.1']
    #allocation6 [shape = 's32[1]{0}', space=sflag, size = 0x4, scoped, tag = 'scoped memory for tpu_custom_call.1']
    #allocation7 [shape = 'u8[98304]{0}', space=vmem, size = 0x18000, scoped, tag = 'input window, operand 1, single buffered']
    #allocation8 [shape = 's32[1]{0}', space=sflag, size = 0x4, scoped, tag = 'scoped memory for tpu_custom_call.1']
    #allocation9 [shape = 'u8[98304]{0}', space=vmem, size = 0x18000, scoped, tag = 'input window, operand 2, single buffered']
    #allocation10 [shape = 'u8[4096]{0}', space=vmem, size = 0x1000, scoped, tag = 'output window, operand 0, single buffered']
    %10 = vsyncpa [#allocation5], 0
    %11 = vsyncpa [#allocation8], 0
    %12 = vsyncpa [#allocation6], 0
    // Predicated region
    $region2: #{tpu_custom_call.1} parent=1 // pred_check
      _
    $region3: #{tpu_custom_call.1} parent=1 // pred_check_branch
      %14 = sbr.rel (0) target = $region5
    $region4: #{tpu_custom_call.1} parent=1 // pred_region
      %s16 = ssub.s32 512, 512
      %17 = vsyncadd [#allocation5], %s16
      %s18 = sshll.u32 [#allocation4], 4
      %s19 = int_to_ptr.vmem [resolvable:$true] %s18
      %24 = dma.hbm_to_vmem [thread:$0]  %s0, 512, %s19, [#allocation5], 64, 64, 4
    $region5: #{tpu_custom_call.1} parent=1 // pred_fallthru
      _
    // Predicated region
    $region6: #{tpu_custom_call.1} parent=1 // pred_check
      _
    $region7: #{tpu_custom_call.1} parent=1 // pred_check_branch
      %26 = sbr.rel (0) target = $region9
    $region8: #{tpu_custom_call.1} parent=1 // pred_region
      %s28 = ssub.s32 3072, 3072
      %29 = vsyncadd [#allocation8], %s28
      %s30 = sshll.u32 [#allocation7], 4
      %s31 = int_to_ptr.vmem [resolvable:$true] %s30
      %36 = dma.hbm_to_vmem [thread:$0]  %s1, 3072, %s31, [#allocation8], 192, 192, 12
    $region9: #{tpu_custom_call.1} parent=1 // pred_fallthru
      _
    // Predicated region
    $region10: #{tpu_custom_call.1} parent=1 // pred_check
      _
    $region11: #{tpu_custom_call.1} parent=1 // pred_check_branch
      %38 = sbr.rel (0) target = $region13
    $region12: #{tpu_custom_call.1} parent=1 // pred_region
      %s40 = ssub.s32 3072, 3072
      %41 = vsyncadd [#allocation8], %s40
      %s42 = sshll.u32 [#allocation9], 4
      %s43 = int_to_ptr.vmem [resolvable:$true] %s42
      %48 = dma.hbm_to_vmem [thread:$0]  %s2, 3072, %s43, [#allocation8], 192, 192, 12
    $region13: #{tpu_custom_call.1} parent=1 // pred_fallthru
      _
    // Predicated region
    $region14: #{tpu_custom_call.1} parent=1 // pred_check
      _
    $region15: #{tpu_custom_call.1} parent=1 // pred_check_branch
      %50 = sbr.rel (0) target = $region17
    $region16: #{tpu_custom_call.1} parent=1 // pred_region
      _
    $region17: #{tpu_custom_call.1} parent=1 // pred_fallthru
      _
    // Predicated region
    $region18: #{tpu_custom_call.1} parent=1 // pred_check
      _
    $region19: #{tpu_custom_call.1} parent=1 // pred_check_branch
      %52 = sbr.rel (0) target = $region21
    $region20: #{tpu_custom_call.1} parent=1 // pred_region
      _
    $region21: #{tpu_custom_call.1} parent=1 // pred_fallthru
      _
    // Predicated region
    $region22: #{tpu_custom_call.1} parent=1 // pred_check
      _
    $region23: #{tpu_custom_call.1} parent=1 // pred_check_branch
      %54 = sbr.rel (0) target = $region25
    $region24: #{tpu_custom_call.1} parent=1 // pred_region
      %55 = dma.done [#allocation5], 512
    $region25: #{tpu_custom_call.1} parent=1 // pred_fallthru
      _
    // Predicated region
    $region26: #{tpu_custom_call.1} parent=1 // pred_check
      _
    $region27: #{tpu_custom_call.1} parent=1 // pred_check_branch
      %57 = sbr.rel (0) target = $region29
    $region28: #{tpu_custom_call.1} parent=1 // pred_region
      %58 = dma.done [#allocation8], 3072
    $region29: #{tpu_custom_call.1} parent=1 // pred_fallthru
      _
    // Predicated region
    $region30: #{tpu_custom_call.1} parent=1 // pred_check
      _
    $region31: #{tpu_custom_call.1} parent=1 // pred_check_branch
      %60 = sbr.rel (0) target = $region33
    $region32: #{tpu_custom_call.1} parent=1 // pred_region
      %61 = dma.done [#allocation8], 3072
    $region33: #{tpu_custom_call.1} parent=1 // pred_fallthru
      _
    %p63 = scmp.eq.s32.totalorder 0, 0
    // Predicated region
    $region34: #{tpu_custom_call.1} parent=1 // pred_check
      %p64 = pneg %p63
    $region35: #{tpu_custom_call.1} parent=1 // pred_check_branch
      %66 = sbr.rel (%p64) target = $region37
    $region36: #{tpu_custom_call.1} parent=1 // pred_region
      %67 = vst [vmem:[#allocation3] sm:$0xff] 0.0
    $region37: #{tpu_custom_call.1} parent=1 // pred_fallthru
      _
    %v68 = vld [vmem:[#allocation4] sm:$0xf]
    %v69 = vld [vmem:[#allocation4 + $0x4] sm:$0xf]
    %v70 = vld [vmem:[#allocation4 + $0x8] sm:$0xf]
    %v71 = vld [vmem:[#allocation4 + $0xc] sm:$0xf]
    %v72 = vld [vmem:[#allocation4 + $0x10] sm:$0xf]
    %v73 = vld [vmem:[#allocation4 + $0x14] sm:$0xf]
    %v74 = vld [vmem:[#allocation4 + $0x18] sm:$0xf]
    %v75 = vld [vmem:[#allocation4 + $0x1c] sm:$0xf]
    %v76 = vld [vmem:[#allocation7] sm:$0xff]
    %v77 = vld [vmem:[#allocation7 + $0x8] sm:$0xf]
    %v78 = vld [vmem:[#allocation7 + $0xc] sm:$0xff]
    %v79 = vld [vmem:[#allocation7 + $0x14] sm:$0xf]
    %v80 = vld [vmem:[#allocation7 + $0x18] sm:$0xff]
    %v81 = vld [vmem:[#allocation7 + $0x20] sm:$0xf]
    %v82 = vld [vmem:[#allocation7 + $0x24] sm:$0xff]
    %v83 = vld [vmem:[#allocation7 + $0x2c] sm:$0xf]
    %v84 = vld [vmem:[#allocation7 + $0x30] sm:$0xff]
    %v85 = vld [vmem:[#allocation7 + $0x38] sm:$0xf]
    %v86 = vld [vmem:[#allocation7 + $0x3c] sm:$0xff]
    %v87 = vld [vmem:[#allocation7 + $0x44] sm:$0xf]
    %v88 = vld [vmem:[#allocation7 + $0x48] sm:$0xff]
    %v89 = vld [vmem:[#allocation7 + $0x50] sm:$0xf]
    %v90 = vld [vmem:[#allocation7 + $0x54] sm:$0xff]
    %v91 = vld [vmem:[#allocation7 + $0x5c] sm:$0xf]
    %v92 = vld [vmem:[#allocation7 + $0x60] sm:$0xff]
    %v93 = vld [vmem:[#allocation7 + $0x68] sm:$0xf]
    %v94 = vld [vmem:[#allocation7 + $0x6c] sm:$0xff]
    %v95 = vld [vmem:[#allocation7 + $0x74] sm:$0xf]
    %v96 = vld [vmem:[#allocation7 + $0x78] sm:$0xff]
    %v97 = vld [vmem:[#allocation7 + $0x80] sm:$0xf]
    %v98 = vld [vmem:[#allocation7 + $0x84] sm:$0xff]
    %v99 = vld [vmem:[#allocation7 + $0x8c] sm:$0xf]
    %v100 = vld [vmem:[#allocation7 + $0x90] sm:$0xff]
    %v101 = vld [vmem:[#allocation7 + $0x98] sm:$0xf]
    %v102 = vld [vmem:[#allocation7 + $0x9c] sm:$0xff]
    %v103 = vld [vmem:[#allocation7 + $0xa4] sm:$0xf]
    %v104 = vld [vmem:[#allocation7 + $0xa8] sm:$0xff]
    %v105 = vld [vmem:[#allocation7 + $0xb0] sm:$0xf]
    %v106 = vld [vmem:[#allocation7 + $0xb4] sm:$0xff]
    %v107 = vld [vmem:[#allocation7 + $0xbc] sm:$0xf]
    %v108 = vld [vmem:[%s3] sm:$0x7]
    %v110 = vlaneseq
    %v111 = vshrl.u32 %v110, 7
    %v112 = vsub.s32 0, %v111
    %v113 = vrot.slane %v108, %v112
    %v114 = vlaneseq
    %v115 = vshrl.u32 %v114, 7
    %v116 = vsub.s32 1, %v115
    %v117 = vrot.slane %v108, %v116
    %v118 = vlaneseq
    %v119 = vshrl.u32 %v118, 7
    %v120 = vsub.s32 2, %v119
    %v121 = vrot.slane %v108, %v120
    %v133 = vunpack.c.l.b16 %v68
    %v134 = vunpack.c.l.b16 %v69
    %v135 = vunpack.c.l.b16 %v70
    %v136 = vunpack.c.l.b16 %v71
    %v137 = vunpack.c.l.b16 %v72
    %v138 = vunpack.c.l.b16 %v73
    %v139 = vunpack.c.l.b16 %v74
    %v140 = vunpack.c.l.b16 %v75
    %v141 = vpack.c.b16 %v134, %v133
    %v142 = vpack.c.b16 %v136, %v135
    %v143 = vpack.c.b16 %v138, %v137
    %v144 = vpack.c.b16 %v140, %v139
    %v181 = vunpack.c.l.b16 %v76
    %v182 = vunpack.c.h.b16 %v76
    %v183 = vunpack.c.l.b16 %v77
    %v184 = vunpack.c.l.b16 %v78
    %v185 = vunpack.c.h.b16 %v78
    %v186 = vunpack.c.l.b16 %v79
    %v187 = vunpack.c.l.b16 %v80
    %v188 = vunpack.c.h.b16 %v80
    %v189 = vunpack.c.l.b16 %v81
    %v190 = vunpack.c.l.b16 %v82
    %v191 = vunpack.c.h.b16 %v82
    %v192 = vunpack.c.l.b16 %v83
    %v193 = vunpack.c.l.b16 %v84
    %v194 = vunpack.c.h.b16 %v84
    %v195 = vunpack.c.l.b16 %v85
    %v196 = vunpack.c.l.b16 %v86
    %v197 = vunpack.c.h.b16 %v86
    %v198 = vunpack.c.l.b16 %v87
    %v199 = vunpack.c.l.b16 %v88
    %v200 = vunpack.c.h.b16 %v88
    %v201 = vunpack.c.l.b16 %v89
    %v202 = vunpack.c.l.b16 %v90
    %v203 = vunpack.c.h.b16 %v90
    %v204 = vunpack.c.l.b16 %v91
    %v205 = vunpack.c.l.b16 %v92
    %v206 = vunpack.c.h.b16 %v92
    %v207 = vunpack.c.l.b16 %v93
    %v208 = vunpack.c.l.b16 %v94
    %v209 = vunpack.c.h.b16 %v94
    %v210 = vunpack.c.l.b16 %v95
    %v211 = vunpack.c.l.b16 %v96
    %v212 = vunpack.c.h.b16 %v96
    %v213 = vunpack.c.l.b16 %v97
    %v214 = vunpack.c.l.b16 %v98
    %v215 = vunpack.c.h.b16 %v98
    %v216 = vunpack.c.l.b16 %v99
    %v217 = vunpack.c.l.b16 %v100
    %v218 = vunpack.c.h.b16 %v100
    %v219 = vunpack.c.l.b16 %v101
    %v220 = vunpack.c.l.b16 %v102
    %v221 = vunpack.c.h.b16 %v102
    %v222 = vunpack.c.l.b16 %v103
    %v223 = vunpack.c.l.b16 %v104
    %v224 = vunpack.c.h.b16 %v104
    %v225 = vunpack.c.l.b16 %v105
    %v226 = vunpack.c.l.b16 %v106
    %v227 = vunpack.c.h.b16 %v106
    %v228 = vunpack.c.l.b16 %v107
    %v229 = vpack.c.b16 %v184, %v181
    %v230 = vpack.c.b16 %v185, %v182
    %v231 = vpack.c.b16 %v186, %v183
    %v232 = vpack.c.b16 %v190, %v187
    %v233 = vpack.c.b16 %v191, %v188
    %v234 = vpack.c.b16 %v192, %v189
    %v235 = vpack.c.b16 %v196, %v193
    %v236 = vpack.c.b16 %v197, %v194
    %v237 = vpack.c.b16 %v198, %v195
    %v238 = vpack.c.b16 %v202, %v199
    %v239 = vpack.c.b16 %v203, %v200
    %v240 = vpack.c.b16 %v204, %v201
    %v241 = vpack.c.b16 %v208, %v205
    %v242 = vpack.c.b16 %v209, %v206
    %v243 = vpack.c.b16 %v210, %v207
    %v244 = vpack.c.b16 %v214, %v211
    %v245 = vpack.c.b16 %v215, %v212
    %v246 = vpack.c.b16 %v216, %v213
    %v247 = vpack.c.b16 %v220, %v217
    %v248 = vpack.c.b16 %v221, %v218
    %v249 = vpack.c.b16 %v222, %v219
    %v250 = vpack.c.b16 %v226, %v223
    %v251 = vpack.c.b16 %v227, %v224
    %v252 = vpack.c.b16 %v228, %v225
    %277 = vmatprep.subr.bf16.mxu0 %v230
    %278 = vmatpush1.bf16.msra.mxu0 %v229
    %279 = vmatprep.subr.bf16.mxu0 %v233
    %280 = vmatpush1.bf16.msra.mxu0 %v232
    %281 = vmatprep.subr.bf16.mxu0 %v236
    %282 = vmatpush1.bf16.msra.mxu0 %v235
    %283 = vmatprep.subr.bf16.mxu0 %v239
    %284 = vmatpush1.bf16.msra.mxu0 %v238
    %285 = vmatprep.subr.bf16.mxu0 %v242
    %286 = vmatpush1.bf16.msra.mxu0 %v241
    %287 = vmatprep.subr.bf16.mxu0 %v245
    %288 = vmatpush1.bf16.msra.mxu0 %v244
    %289 = vmatprep.subr.bf16.mxu0 %v248
    %290 = vmatpush1.bf16.msra.mxu0 %v247
    %291 = vmatprep.subr.bf16.mxu0 %v251
    %292 = vmatpush1.bf16.msra.mxu0 %v250
    %293 = vmatprep.subr.bf16.mxu0 0
    %294 = vmatpush1.bf16.msra.mxu0 0
    %295 = vmatprep.subr.bf16.mxu0 0
    %296 = vmatpush1.bf16.msra.mxu0 0
    %297 = vmatprep.subr.bf16.mxu0 0
    %298 = vmatpush1.bf16.msra.mxu0 0
    %299 = vmatprep.subr.bf16.mxu0 0
    %300 = vmatpush1.bf16.msra.mxu0 0
    %301 = vmatprep.subr.bf16.mxu0 0
    %302 = vmatpush1.bf16.msra.mxu0 0
    %303 = vmatprep.subr.bf16.mxu0 0
    %304 = vmatpush1.bf16.msra.mxu0 0
    %305 = vmatprep.subr.bf16.mxu0 0
    %306 = vmatpush1.bf16.msra.mxu0 0
    %307 = vmatprep.subr.bf16.mxu0 0
    %308 = vmatpush1.bf16.msra.mxu0 0
    %309 = vmatprep.mubr.bf16.mxu0 0
    %310 = vmatmul.mubr.bf16.gmra.mrb[0].mxu0 %v141
    %v311 = vpop.f32.mrb[0].mxu0
    %v312 = vadd.f32 %v113, %v311
    %v313 = vpop.f32.mrb[0].mxu0
    %v314 = vadd.f32 %v117, %v313
    %v315 = vpop.f32.mrb[0].mxu0
    %v316 = vadd.f32 %v113, %v315
    %v317 = vpop.f32.mrb[0].mxu0
    %v318 = vadd.f32 %v117, %v317
    %319 = vmatprep.mubr.bf16.mxu0 0
    %320 = vmatmul.mubr.bf16.gmra.mrb[0].mxu0 %v142
    %v321 = vpop.f32.mrb[0].mxu0
    %v322 = vadd.f32 %v113, %v321
    %v323 = vpop.f32.mrb[0].mxu0
    %v324 = vadd.f32 %v117, %v323
    %v325 = vpop.f32.mrb[0].mxu0
    %v326 = vadd.f32 %v113, %v325
    %v327 = vpop.f32.mrb[0].mxu0
    %v328 = vadd.f32 %v117, %v327
    %329 = vmatprep.mubr.bf16.mxu0 0
    %330 = vmatmul.mubr.bf16.gmra.mrb[0].mxu0 %v143
    %v331 = vpop.f32.mrb[0].mxu0
    %v332 = vadd.f32 %v113, %v331
    %v333 = vpop.f32.mrb[0].mxu0
    %v334 = vadd.f32 %v117, %v333
    %v335 = vpop.f32.mrb[0].mxu0
    %v336 = vadd.f32 %v113, %v335
    %v337 = vpop.f32.mrb[0].mxu0
    %v338 = vadd.f32 %v117, %v337
    %339 = vmatprep.mubr.bf16.mxu0 0
    %340 = vmatmul.mubr.bf16.gmra.mrb[0].mxu0 %v144
    %v341 = vpop.f32.mrb[0].mxu0
    %v342 = vadd.f32 %v113, %v341
    %v343 = vpop.f32.mrb[0].mxu0
    %v344 = vadd.f32 %v117, %v343
    %v345 = vpop.f32.mrb[0].mxu0
    %v346 = vadd.f32 %v113, %v345
    %v347 = vpop.f32.mrb[0].mxu0
    %v348 = vadd.f32 %v117, %v347
    %349 = vdwg.mxu0
    %350 = vmatprep.subr.bf16.mxu0 0
    %351 = vmatpush1.bf16.msra.mxu0 %v231
    %352 = vmatprep.subr.bf16.mxu0 0
    %353 = vmatpush1.bf16.msra.mxu0 %v234
    %354 = vmatprep.subr.bf16.mxu0 0
    %355 = vmatpush1.bf16.msra.mxu0 %v237
    %356 = vmatprep.subr.bf16.mxu0 0
    %357 = vmatpush1.bf16.msra.mxu0 %v240
    %358 = vmatprep.subr.bf16.mxu0 0
    %359 = vmatpush1.bf16.msra.mxu0 %v243
    %360 = vmatprep.subr.bf16.mxu0 0
    %361 = vmatpush1.bf16.msra.mxu0 %v246
    %362 = vmatprep.subr.bf16.mxu0 0
    %363 = vmatpush1.bf16.msra.mxu0 %v249
    %364 = vmatprep.subr.bf16.mxu0 0
    %365 = vmatpush1.bf16.msra.mxu0 %v252
    %366 = vmatprep.subr.bf16.mxu0 0
    %367 = vmatpush1.bf16.msra.mxu0 0
    %368 = vmatprep.subr.bf16.mxu0 0
    %369 = vmatpush1.bf16.msra.mxu0 0
    %370 = vmatprep.subr.bf16.mxu0 0
    %371 = vmatpush1.bf16.msra.mxu0 0
    %372 = vmatprep.subr.bf16.mxu0 0
    %373 = vmatpush1.bf16.msra.mxu0 0
    %374 = vmatprep.subr.bf16.mxu0 0
    %375 = vmatpush1.bf16.msra.mxu0 0
    %376 = vmatprep.subr.bf16.mxu0 0
    %377 = vmatpush1.bf16.msra.mxu0 0
    %378 = vmatprep.subr.bf16.mxu0 0
    %379 = vmatpush1.bf16.msra.mxu0 0
    %380 = vmatprep.subr.bf16.mxu0 0
    %381 = vmatpush1.bf16.msra.mxu0 0
    %382 = vmatprep.mubr.bf16.mxu0 0
    %383 = vmatmul.mubr.bf16.gmra.mrb[0].mxu0 %v141
    %v384 = vpop.f32.mrb[0].mxu0
    %v385 = vadd.f32 %v121, %v384
    %v386 = vpop.f32.mrb[0].mxu0
    %v387 = vpop.f32.mrb[0].mxu0
    %v388 = vadd.f32 %v121, %v387
    %v389 = vpop.f32.mrb[0].mxu0
    %390 = vmatprep.mubr.bf16.mxu0 0
    %391 = vmatmul.mubr.bf16.gmra.mrb[0].mxu0 %v142
    %v392 = vpop.f32.mrb[0].mxu0
    %v393 = vadd.f32 %v121, %v392
    %v394 = vpop.f32.mrb[0].mxu0
    %v395 = vpop.f32.mrb[0].mxu0
    %v396 = vadd.f32 %v121, %v395
    %v397 = vpop.f32.mrb[0].mxu0
    %398 = vmatprep.mubr.bf16.mxu0 0
    %399 = vmatmul.mubr.bf16.gmra.mrb[0].mxu0 %v143
    %v400 = vpop.f32.mrb[0].mxu0
    %v401 = vadd.f32 %v121, %v400
    %v402 = vpop.f32.mrb[0].mxu0
    %v403 = vpop.f32.mrb[0].mxu0
    %v404 = vadd.f32 %v121, %v403
    %v405 = vpop.f32.mrb[0].mxu0
    %406 = vmatprep.mubr.bf16.mxu0 0
    %407 = vmatmul.mubr.bf16.gmra.mrb[0].mxu0 %v144
    %v408 = vpop.f32.mrb[0].mxu0
    %v409 = vadd.f32 %v121, %v408
    %v410 = vpop.f32.mrb[0].mxu0
    %v411 = vpop.f32.mrb[0].mxu0
    %v412 = vadd.f32 %v121, %v411
    %v413 = vpop.f32.mrb[0].mxu0
    %414 = vdwg.mxu0
    %415 = vst [vmem:[#allocation2] sm:$0xff] %v312
    %416 = vst [vmem:[#allocation2 + $0x8] sm:$0xff] %v314
    %417 = vst [vmem:[#allocation2 + $0x10] sm:$0xff] %v385
    %418 = vst [vmem:[#allocation2 + $0x18] sm:$0xff] %v316
    %419 = vst [vmem:[#allocation2 + $0x20] sm:$0xff] %v318
    %420 = vst [vmem:[#allocation2 + $0x28] sm:$0xff] %v388
    %421 = vst [vmem:[#allocation2 + $0x30] sm:$0xff] %v322
    %422 = vst [vmem:[#allocation2 + $0x38] sm:$0xff] %v324
    %423 = vst [vmem:[#allocation2 + $0x40] sm:$0xff] %v393
    %424 = vst [vmem:[#allocation2 + $0x48] sm:$0xff] %v326
    %425 = vst [vmem:[#allocation2 + $0x50] sm:$0xff] %v328
    %426 = vst [vmem:[#allocation2 + $0x58] sm:$0xff] %v396
    %427 = vst [vmem:[#allocation2 + $0x60] sm:$0xff] %v332
    %428 = vst [vmem:[#allocation2 + $0x68] sm:$0xff] %v334
    %429 = vst [vmem:[#allocation2 + $0x70] sm:$0xff] %v401
    %430 = vst [vmem:[#allocation2 + $0x78] sm:$0xff] %v336
    %431 = vst [vmem:[#allocation2 + $0x80] sm:$0xff] %v338
    %432 = vst [vmem:[#allocation2 + $0x88] sm:$0xff] %v404
    %433 = vst [vmem:[#allocation2 + $0x90] sm:$0xff] %v342
    %434 = vst [vmem:[#allocation2 + $0x98] sm:$0xff] %v344
    %435 = vst [vmem:[#allocation2 + $0xa0] sm:$0xff] %v409
    %436 = vst [vmem:[#allocation2 + $0xa8] sm:$0xff] %v346
    %437 = vst [vmem:[#allocation2 + $0xb0] sm:$0xff] %v348
    %438 = vst [vmem:[#allocation2 + $0xb8] sm:$0xff] %v412
    %v439 = vld [vmem:[%s4] sm:$0x1]
    %v441 = vlaneseq
    %v442 = vshrl.u32 %v441, 7
    %v443 = vsub.s32 0, %v442
    %v444 = vrot.slane %v439, %v443
    %v446 = vld [vmem:[#allocation3] sm:$0xff]
    %v447 = vpack.c.bf16 %v446, %v446
    %v448 = vld [vmem:[#allocation9] sm:$0xf]
    %v449 = vld [vmem:[#allocation9 + $0xc] sm:$0xf]
    %v450 = vld [vmem:[#allocation9 + $0x18] sm:$0xf]
    %v451 = vld [vmem:[#allocation9 + $0x24] sm:$0xf]
    %v452 = vld [vmem:[#allocation9 + $0x30] sm:$0xf]
    %v453 = vld [vmem:[#allocation9 + $0x3c] sm:$0xf]
    %v454 = vld [vmem:[#allocation9 + $0x48] sm:$0xf]
    %v455 = vld [vmem:[#allocation9 + $0x54] sm:$0xf]
    %v456 = vld [vmem:[#allocation9 + $0x60] sm:$0xf]
    %v457 = vld [vmem:[#allocation9 + $0x6c] sm:$0xf]
    %v458 = vld [vmem:[#allocation9 + $0x78] sm:$0xf]
    %v459 = vld [vmem:[#allocation9 + $0x84] sm:$0xf]
    %v460 = vld [vmem:[#allocation9 + $0x90] sm:$0xf]
    %v461 = vld [vmem:[#allocation9 + $0x9c] sm:$0xf]
    %v462 = vld [vmem:[#allocation9 + $0xa8] sm:$0xf]
    %v463 = vld [vmem:[#allocation9 + $0xb4] sm:$0xf]
    %v480 = vunpack.c.l.b16 %v448
    %v481 = vunpack.c.l.b16 %v449
    %v482 = vunpack.c.l.b16 %v450
    %v483 = vunpack.c.l.b16 %v451
    %v484 = vunpack.c.l.b16 %v452
    %v485 = vunpack.c.l.b16 %v453
    %v486 = vunpack.c.l.b16 %v454
    %v487 = vunpack.c.l.b16 %v455
    %v488 = vunpack.c.l.b16 %v456
    %v489 = vunpack.c.l.b16 %v457
    %v490 = vunpack.c.l.b16 %v458
    %v491 = vunpack.c.l.b16 %v459
    %v492 = vunpack.c.l.b16 %v460
    %v493 = vunpack.c.l.b16 %v461
    %v494 = vunpack.c.l.b16 %v462
    %v495 = vunpack.c.l.b16 %v463
    %v496 = vpack.c.b16 %v481, %v480
    %v497 = vpack.c.b16 %v483, %v482
    %v498 = vpack.c.b16 %v485, %v484
    %v499 = vpack.c.b16 %v487, %v486
    %v500 = vpack.c.b16 %v489, %v488
    %v501 = vpack.c.b16 %v491, %v490
    %v502 = vpack.c.b16 %v493, %v492
    %v503 = vpack.c.b16 %v495, %v494
    %512 = vmatprep.subr.bf16.mxu0 0
    %513 = vmatpush1.bf16.msra.mxu0 %v496
    %514 = vmatprep.subr.bf16.mxu0 0
    %515 = vmatpush1.bf16.msra.mxu0 %v497
    %516 = vmatprep.subr.bf16.mxu0 0
    %517 = vmatpush1.bf16.msra.mxu0 %v498
    %518 = vmatprep.subr.bf16.mxu0 0
    %519 = vmatpush1.bf16.msra.mxu0 %v499
    %520 = vmatprep.subr.bf16.mxu0 0
    %521 = vmatpush1.bf16.msra.mxu0 %v500
    %522 = vmatprep.subr.bf16.mxu0 0
    %523 = vmatpush1.bf16.msra.mxu0 %v501
    %524 = vmatprep.subr.bf16.mxu0 0
    %525 = vmatpush1.bf16.msra.mxu0 %v502
    %526 = vmatprep.subr.bf16.mxu0 0
    %527 = vmatpush1.bf16.msra.mxu0 %v503
    %528 = vmatprep.subr.bf16.mxu0 0
    %529 = vmatpush1.bf16.msra.mxu0 0
    %530 = vmatprep.subr.bf16.mxu0 0
    %531 = vmatpush1.bf16.msra.mxu0 0
    %532 = vmatprep.subr.bf16.mxu0 0
    %533 = vmatpush1.bf16.msra.mxu0 0
    %534 = vmatprep.subr.bf16.mxu0 0
    %535 = vmatpush1.bf16.msra.mxu0 0
    %536 = vmatprep.subr.bf16.mxu0 0
    %537 = vmatpush1.bf16.msra.mxu0 0
    %538 = vmatprep.subr.bf16.mxu0 0
    %539 = vmatpush1.bf16.msra.mxu0 0
    %540 = vmatprep.subr.bf16.mxu0 0
    %541 = vmatpush1.bf16.msra.mxu0 0
    %542 = vmatprep.subr.bf16.mxu0 0
    %543 = vmatpush1.bf16.msra.mxu0 0
    %544 = vmatprep.mubr.bf16.mxu0 0
    %545 = vmatmul.mubr.bf16.gmra.mrb[0].mxu0 %v447
    %v546 = vpop.f32.mrb[0].mxu0
    %v547 = vadd.f32 0.0, %v546
    %v548 = vpop.f32.mrb[0].mxu0
    %v549 = vpop.f32.mrb[0].mxu0
    %v550 = vpop.f32.mrb[0].mxu0
    %551 = vdwg.mxu0
    %s552 = smul.u32 0, 3
    %s553 = smul.addr %s552, 8
    %s554 = scalar_lea.vmem [#allocation2], %s553
    %v555 = vld [vmem:[%s554] sm:$0xff]
    %v556 = vadd.f32 %v555, %v547
    %v557 = vxor.u32 %v556, 2147483648
    %v558 = vmul.f32 %v557, 1.442695
    %v559 = vpow.pop %v558
    %v560 = vadd.f32 %v559, 1.0
    %v561 = vrcp.pop %v560
    %v562 = vmul.f32 1.0, %v561
    %v563 = vld [vmem:[#allocation9 + $0x4] sm:$0xf]
    %v564 = vld [vmem:[#allocation9 + $0x10] sm:$0xf]
    %v565 = vld [vmem:[#allocation9 + $0x1c] sm:$0xf]
    %v566 = vld [vmem:[#allocation9 + $0x28] sm:$0xf]
    %v567 = vld [vmem:[#allocation9 + $0x34] sm:$0xf]
    %v568 = vld [vmem:[#allocation9 + $0x40] sm:$0xf]
    %v569 = vld [vmem:[#allocation9 + $0x4c] sm:$0xf]
    %v570 = vld [vmem:[#allocation9 + $0x58] sm:$0xf]
    %v571 = vld [vmem:[#allocation9 + $0x64] sm:$0xf]
    %v572 = vld [vmem:[#allocation9 + $0x70] sm:$0xf]
    %v573 = vld [vmem:[#allocation9 + $0x7c] sm:$0xf]
    %v574 = vld [vmem:[#allocation9 + $0x88] sm:$0xf]
    %v575 = vld [vmem:[#allocation9 + $0x94] sm:$0xf]
    %v576 = vld [vmem:[#allocation9 + $0xa0] sm:$0xf]
    %v577 = vld [vmem:[#allocation9 + $0xac] sm:$0xf]
    %v578 = vld [vmem:[#allocation9 + $0xb8] sm:$0xf]
    %v595 = vunpack.c.l.b16 %v563
    %v596 = vunpack.c.l.b16 %v564
    %v597 = vunpack.c.l.b16 %v565
    %v598 = vunpack.c.l.b16 %v566
    %v599 = vunpack.c.l.b16 %v567
    %v600 = vunpack.c.l.b16 %v568
    %v601 = vunpack.c.l.b16 %v569
    %v602 = vunpack.c.l.b16 %v570
    %v603 = vunpack.c.l.b16 %v571
    %v604 = vunpack.c.l.b16 %v572
    %v605 = vunpack.c.l.b16 %v573
    %v606 = vunpack.c.l.b16 %v574
    %v607 = vunpack.c.l.b16 %v575
    %v608 = vunpack.c.l.b16 %v576
    %v609 = vunpack.c.l.b16 %v577
    %v610 = vunpack.c.l.b16 %v578
    %v611 = vpack.c.b16 %v596, %v595
    %v612 = vpack.c.b16 %v598, %v597
    %v613 = vpack.c.b16 %v600, %v599
    %v614 = vpack.c.b16 %v602, %v601
    %v615 = vpack.c.b16 %v604, %v603
    %v616 = vpack.c.b16 %v606, %v605
    %v617 = vpack.c.b16 %v608, %v607
    %v618 = vpack.c.b16 %v610, %v609
    %627 = vmatprep.subr.bf16.mxu0 0
    %628 = vmatpush1.bf16.msra.mxu0 %v611
    %629 = vmatprep.subr.bf16.mxu0 0
    %630 = vmatpush1.bf16.msra.mxu0 %v612
    %631 = vmatprep.subr.bf16.mxu0 0
    %632 = vmatpush1.bf16.msra.mxu0 %v613
    %633 = vmatprep.subr.bf16.mxu0 0
    %634 = vmatpush1.bf16.msra.mxu0 %v614
    %635 = vmatprep.subr.bf16.mxu0 0
    %636 = vmatpush1.bf16.msra.mxu0 %v615
    %637 = vmatprep.subr.bf16.mxu0 0
    %638 = vmatpush1.bf16.msra.mxu0 %v616
    %639 = vmatprep.subr.bf16.mxu0 0
    %640 = vmatpush1.bf16.msra.mxu0 %v617
    %641 = vmatprep.subr.bf16.mxu0 0
    %642 = vmatpush1.bf16.msra.mxu0 %v618
    %643 = vmatprep.subr.bf16.mxu0 0
    %644 = vmatpush1.bf16.msra.mxu0 0
    %645 = vmatprep.subr.bf16.mxu0 0
    %646 = vmatpush1.bf16.msra.mxu0 0
    %647 = vmatprep.subr.bf16.mxu0 0
    %648 = vmatpush1.bf16.msra.mxu0 0
    %649 = vmatprep.subr.bf16.mxu0 0
    %650 = vmatpush1.bf16.msra.mxu0 0
    %651 = vmatprep.subr.bf16.mxu0 0
    %652 = vmatpush1.bf16.msra.mxu0 0
    %653 = vmatprep.subr.bf16.mxu0 0
    %654 = vmatpush1.bf16.msra.mxu0 0
    %655 = vmatprep.subr.bf16.mxu0 0
    %656 = vmatpush1.bf16.msra.mxu0 0
    %657 = vmatprep.subr.bf16.mxu0 0
    %658 = vmatpush1.bf16.msra.mxu0 0
    %659 = vmatprep.mubr.bf16.mxu0 0
    %660 = vmatmul.mubr.bf16.gmra.mrb[0].mxu0 %v447
    %v661 = vpop.f32.mrb[0].mxu0
    %v662 = vadd.f32 0.0, %v661
    %v663 = vpop.f32.mrb[0].mxu0
    %v664 = vpop.f32.mrb[0].mxu0
    %v665 = vpop.f32.mrb[0].mxu0
    %666 = vdwg.mxu0
    %v667 = vld [vmem:[%s554 + $0x8] sm:$0xff]
    %v668 = vadd.f32 %v667, %v662
    %v669 = vxor.u32 %v668, 2147483648
    %v670 = vmul.f32 %v669, 1.442695
    %v671 = vpow.pop %v670
    %v672 = vadd.f32 %v671, 1.0
    %v673 = vrcp.pop %v672
    %v674 = vmul.f32 1.0, %v673
    %v675 = vld [vmem:[#allocation9 + $0x8] sm:$0xf]
    %v676 = vld [vmem:[#allocation9 + $0x14] sm:$0xf]
    %v677 = vld [vmem:[#allocation9 + $0x20] sm:$0xf]
    %v678 = vld [vmem:[#allocation9 + $0x2c] sm:$0xf]
    %v679 = vld [vmem:[#allocation9 + $0x38] sm:$0xf]
    %v680 = vld [vmem:[#allocation9 + $0x44] sm:$0xf]
    %v681 = vld [vmem:[#allocation9 + $0x50] sm:$0xf]
    %v682 = vld [vmem:[#allocation9 + $0x5c] sm:$0xf]
    %v683 = vld [vmem:[#allocation9 + $0x68] sm:$0xf]
    %v684 = vld [vmem:[#allocation9 + $0x74] sm:$0xf]
    %v685 = vld [vmem:[#allocation9 + $0x80] sm:$0xf]
    %v686 = vld [vmem:[#allocation9 + $0x8c] sm:$0xf]
    %v687 = vld [vmem:[#allocation9 + $0x98] sm:$0xf]
    %v688 = vld [vmem:[#allocation9 + $0xa4] sm:$0xf]
    %v689 = vld [vmem:[#allocation9 + $0xb0] sm:$0xf]
    %v690 = vld [vmem:[#allocation9 + $0xbc] sm:$0xf]
    %v691 = vld [vmem:[%s554 + $0x10] sm:$0xff]
    %v708 = vunpack.c.l.b16 %v675
    %v709 = vunpack.c.l.b16 %v676
    %v710 = vunpack.c.l.b16 %v677
    %v711 = vunpack.c.l.b16 %v678
    %v712 = vunpack.c.l.b16 %v679
    %v713 = vunpack.c.l.b16 %v680
    %v714 = vunpack.c.l.b16 %v681
    %v715 = vunpack.c.l.b16 %v682
    %v716 = vunpack.c.l.b16 %v683
    %v717 = vunpack.c.l.b16 %v684
    %v718 = vunpack.c.l.b16 %v685
    %v719 = vunpack.c.l.b16 %v686
    %v720 = vunpack.c.l.b16 %v687
    %v721 = vunpack.c.l.b16 %v688
    %v722 = vunpack.c.l.b16 %v689
    %v723 = vunpack.c.l.b16 %v690
    %v724 = vpack.c.b16 %v709, %v708
    %v725 = vpack.c.b16 %v711, %v710
    %v726 = vpack.c.b16 %v713, %v712
    %v727 = vpack.c.b16 %v715, %v714
    %v728 = vpack.c.b16 %v717, %v716
    %v729 = vpack.c.b16 %v719, %v718
    %v730 = vpack.c.b16 %v721, %v720
    %v731 = vpack.c.b16 %v723, %v722
    %740 = vmatprep.subr.bf16.mxu0 0
    %741 = vmatpush1.bf16.msra.mxu0 %v724
    %742 = vmatprep.subr.bf16.mxu0 0
    %743 = vmatpush1.bf16.msra.mxu0 %v725
    %744 = vmatprep.subr.bf16.mxu0 0
    %745 = vmatpush1.bf16.msra.mxu0 %v726
    %746 = vmatprep.subr.bf16.mxu0 0
    %747 = vmatpush1.bf16.msra.mxu0 %v727
    %748 = vmatprep.subr.bf16.mxu0 0
    %749 = vmatpush1.bf16.msra.mxu0 %v728
    %750 = vmatprep.subr.bf16.mxu0 0
    %751 = vmatpush1.bf16.msra.mxu0 %v729
    %752 = vmatprep.subr.bf16.mxu0 0
    %753 = vmatpush1.bf16.msra.mxu0 %v730
    %754 = vmatprep.subr.bf16.mxu0 0
    %755 = vmatpush1.bf16.msra.mxu0 %v731
    %756 = vmatprep.subr.bf16.mxu0 0
    %757 = vmatpush1.bf16.msra.mxu0 0
    %758 = vmatprep.subr.bf16.mxu0 0
    %759 = vmatpush1.bf16.msra.mxu0 0
    %760 = vmatprep.subr.bf16.mxu0 0
    %761 = vmatpush1.bf16.msra.mxu0 0
    %762 = vmatprep.subr.bf16.mxu0 0
    %763 = vmatpush1.bf16.msra.mxu0 0
    %764 = vmatprep.subr.bf16.mxu0 0
    %765 = vmatpush1.bf16.msra.mxu0 0
    %766 = vmatprep.subr.bf16.mxu0 0
    %767 = vmatpush1.bf16.msra.mxu0 0
    %768 = vmatprep.subr.bf16.mxu0 0
    %769 = vmatpush1.bf16.msra.mxu0 0
    %770 = vmatprep.subr.bf16.mxu0 0
    %771 = vmatpush1.bf16.msra.mxu0 0
    %772 = vmatprep.mubr.bf16.mxu0 0
    %773 = vmatmul.mubr.bf16.gmra.mrb[0].mxu0 %v447
    %v774 = vpop.f32.mrb[0].mxu0
    %v775 = vadd.f32 %v444, %v774
    %v776 = vpop.f32.mrb[0].mxu0
    %v777 = vpop.f32.mrb[0].mxu0
    %v778 = vpop.f32.mrb[0].mxu0
    %779 = vdwg.mxu0
    %v780 = vmul.f32 %v562, %v775
    %v781 = vadd.f32 %v691, %v780
    %v782 = vtanh.pop %v781
    %v783 = vsub.f32 1.0, %v674
    %v784 = vmul.f32 %v783, %v782
    %v785 = vmul.f32 %v674, %v446
    %v786 = vadd.f32 %v784, %v785
    %v787 = vpack.c.bf16 %v786, %v786
    %788 = vmatprep.subr.bf16.mxu0 0
    %789 = vmatpush1.bf16.msra.mxu0 %v496
    %790 = vmatprep.subr.bf16.mxu0 0
    %791 = vmatpush1.bf16.msra.mxu0 %v497
    %792 = vmatprep.subr.bf16.mxu0 0
    %793 = vmatpush1.bf16.msra.mxu0 %v498
    %794 = vmatprep.subr.bf16.mxu0 0
    %795 = vmatpush1.bf16.msra.mxu0 %v499
    %796 = vmatprep.subr.bf16.mxu0 0
    %797 = vmatpush1.bf16.msra.mxu0 %v500
    %798 = vmatprep.subr.bf16.mxu0 0
    %799 = vmatpush1.bf16.msra.mxu0 %v501
    %800 = vmatprep.subr.bf16.mxu0 0
    %801 = vmatpush1.bf16.msra.mxu0 %v502
    %802 = vmatprep.subr.bf16.mxu0 0
    %803 = vmatpush1.bf16.msra.mxu0 %v503
    %804 = vmatprep.subr.bf16.mxu0 0
    %805 = vmatpush1.bf16.msra.mxu0 0
    %806 = vmatprep.subr.bf16.mxu0 0
    %807 = vmatpush1.bf16.msra.mxu0 0
    %808 = vmatprep.subr.bf16.mxu0 0
    %809 = vmatpush1.bf16.msra.mxu0 0
    %810 = vmatprep.subr.bf16.mxu0 0
    %811 = vmatpush1.bf16.msra.mxu0 0
    %812 = vmatprep.subr.bf16.mxu0 0
    %813 = vmatpush1.bf16.msra.mxu0 0
    %814 = vmatprep.subr.bf16.mxu0 0
    %815 = vmatpush1.bf16.msra.mxu0 0
    %816 = vmatprep.subr.bf16.mxu0 0
    %817 = vmatpush1.bf16.msra.mxu0 0
    %818 = vmatprep.subr.bf16.mxu0 0
    %819 = vmatpush1.bf16.msra.mxu0 0
    %820 = vmatprep.mubr.bf16.mxu0 0
    %821 = vmatmul.mubr.bf16.gmra.mrb[0].mxu0 %v787
    %v822 = vpop.f32.mrb[0].mxu0
    %v823 = vadd.f32 0.0, %v822
    %v824 = vpop.f32.mrb[0].mxu0
    %v825 = vpop.f32.mrb[0].mxu0
    %v826 = vpop.f32.mrb[0].mxu0
    %827 = vdwg.mxu0
    %s828 = smul.u32 1, 3
    %s829 = smul.addr %s828, 8
    %s830 = scalar_lea.vmem [#allocation2], %s829
    %v831 = vld [vmem:[%s830] sm:$0xff]
    %v832 = vadd.f32 %v831, %v823
    %v833 = vxor.u32 %v832, 2147483648
    %v834 = vmul.f32 %v833, 1.442695
    %v835 = vpow.pop %v834
    %v836 = vadd.f32 %v835, 1.0
    %v837 = vrcp.pop %v836
    %v838 = vmul.f32 1.0, %v837
    %839 = vmatprep.subr.bf16.mxu0 0
    %840 = vmatpush1.bf16.msra.mxu0 %v611
    %841 = vmatprep.subr.bf16.mxu0 0
    %842 = vmatpush1.bf16.msra.mxu0 %v612
    %843 = vmatprep.subr.bf16.mxu0 0
    %844 = vmatpush1.bf16.msra.mxu0 %v613
    %845 = vmatprep.subr.bf16.mxu0 0
    %846 = vmatpush1.bf16.msra.mxu0 %v614
    %847 = vmatprep.subr.bf16.mxu0 0
    %848 = vmatpush1.bf16.msra.mxu0 %v615
    %849 = vmatprep.subr.bf16.mxu0 0
    %850 = vmatpush1.bf16.msra.mxu0 %v616
    %851 = vmatprep.subr.bf16.mxu0 0
    %852 = vmatpush1.bf16.msra.mxu0 %v617
    %853 = vmatprep.subr.bf16.mxu0 0
    %854 = vmatpush1.bf16.msra.mxu0 %v618
    %855 = vmatprep.subr.bf16.mxu0 0
    %856 = vmatpush1.bf16.msra.mxu0 0
    %857 = vmatprep.subr.bf16.mxu0 0
    %858 = vmatpush1.bf16.msra.mxu0 0
    %859 = vmatprep.subr.bf16.mxu0 0
    %860 = vmatpush1.bf16.msra.mxu0 0
    %861 = vmatprep.subr.bf16.mxu0 0
    %862 = vmatpush1.bf16.msra.mxu0 0
    %863 = vmatprep.subr.bf16.mxu0 0
    %864 = vmatpush1.bf16.msra.mxu0 0
    %865 = vmatprep.subr.bf16.mxu0 0
    %866 = vmatpush1.bf16.msra.mxu0 0
    %867 = vmatprep.subr.bf16.mxu0 0
    %868 = vmatpush1.bf16.msra.mxu0 0
    %869 = vmatprep.subr.bf16.mxu0 0
    %870 = vmatpush1.bf16.msra.mxu0 0
    %871 = vmatprep.mubr.bf16.mxu0 0
    %872 = vmatmul.mubr.bf16.gmra.mrb[0].mxu0 %v787
    %v873 = vpop.f32.mrb[0].mxu0
    %v874 = vadd.f32 0.0, %v873
    %v875 = vpop.f32.mrb[0].mxu0
    %v876 = vpop.f32.mrb[0].mxu0
    %v877 = vpop.f32.mrb[0].mxu0
    %878 = vdwg.mxu0
    %v879 = vld [vmem:[%s830 + $0x8] sm:$0xff]
    %v880 = vadd.f32 %v879, %v874
    %v881 = vxor.u32 %v880, 2147483648
    %v882 = vmul.f32 %v881, 1.442695
    %v883 = vpow.pop %v882
    %v884 = vadd.f32 %v883, 1.0
    %v885 = vrcp.pop %v884
    %v886 = vmul.f32 1.0, %v885
    %v887 = vld [vmem:[%s830 + $0x10] sm:$0xff]
    %888 = vmatprep.subr.bf16.mxu0 0
    %889 = vmatpush1.bf16.msra.mxu0 %v724
    %890 = vmatprep.subr.bf16.mxu0 0
    %891 = vmatpush1.bf16.msra.mxu0 %v725
    %892 = vmatprep.subr.bf16.mxu0 0
    %893 = vmatpush1.bf16.msra.mxu0 %v726
    %894 = vmatprep.subr.bf16.mxu0 0
    %895 = vmatpush1.bf16.msra.mxu0 %v727
    %896 = vmatprep.subr.bf16.mxu0 0
    %897 = vmatpush1.bf16.msra.mxu0 %v728
    %898 = vmatprep.subr.bf16.mxu0 0
    %899 = vmatpush1.bf16.msra.mxu0 %v729
    %900 = vmatprep.subr.bf16.mxu0 0
    %901 = vmatpush1.bf16.msra.mxu0 %v730
    %902 = vmatprep.subr.bf16.mxu0 0
    %903 = vmatpush1.bf16.msra.mxu0 %v731
    %904 = vmatprep.subr.bf16.mxu0 0
    %905 = vmatpush1.bf16.msra.mxu0 0
    %906 = vmatprep.subr.bf16.mxu0 0
    %907 = vmatpush1.bf16.msra.mxu0 0
    %908 = vmatprep.subr.bf16.mxu0 0
    %909 = vmatpush1.bf16.msra.mxu0 0
    %910 = vmatprep.subr.bf16.mxu0 0
    %911 = vmatpush1.bf16.msra.mxu0 0
    %912 = vmatprep.subr.bf16.mxu0 0
    %913 = vmatpush1.bf16.msra.mxu0 0
    %914 = vmatprep.subr.bf16.mxu0 0
    %915 = vmatpush1.bf16.msra.mxu0 0
    %916 = vmatprep.subr.bf16.mxu0 0
    %917 = vmatpush1.bf16.msra.mxu0 0
    %918 = vmatprep.subr.bf16.mxu0 0
    %919 = vmatpush1.bf16.msra.mxu0 0
    %920 = vmatprep.mubr.bf16.mxu0 0
    %921 = vmatmul.mubr.bf16.gmra.mrb[0].mxu0 %v787
    %v922 = vpop.f32.mrb[0].mxu0
    %v923 = vadd.f32 %v444, %v922
    %v924 = vpop.f32.mrb[0].mxu0
    %v925 = vpop.f32.mrb[0].mxu0
    %v926 = vpop.f32.mrb[0].mxu0
    %927 = vdwg.mxu0
    %v928 = vmul.f32 %v838, %v923
    %v929 = vadd.f32 %v887, %v928
    %v930 = vtanh.pop %v929
    %v931 = vsub.f32 1.0, %v886
    %v932 = vmul.f32 %v931, %v930
    %v933 = vmul.f32 %v886, %v786
    %v934 = vadd.f32 %v932, %v933
    %v935 = vpack.c.bf16 %v934, %v934
    %936 = vmatprep.subr.bf16.mxu0 0
    %937 = vmatpush1.bf16.msra.mxu0 %v496
    %938 = vmatprep.subr.bf16.mxu0 0
    %939 = vmatpush1.bf16.msra.mxu0 %v497
    %940 = vmatprep.subr.bf16.mxu0 0
    %941 = vmatpush1.bf16.msra.mxu0 %v498
    %942 = vmatprep.subr.bf16.mxu0 0
    %943 = vmatpush1.bf16.msra.mxu0 %v499
    %944 = vmatprep.subr.bf16.mxu0 0
    %945 = vmatpush1.bf16.msra.mxu0 %v500
    %946 = vmatprep.subr.bf16.mxu0 0
    %947 = vmatpush1.bf16.msra.mxu0 %v501
    %948 = vmatprep.subr.bf16.mxu0 0
    %949 = vmatpush1.bf16.msra.mxu0 %v502
    %950 = vmatprep.subr.bf16.mxu0 0
    %951 = vmatpush1.bf16.msra.mxu0 %v503
    %952 = vmatprep.subr.bf16.mxu0 0
    %953 = vmatpush1.bf16.msra.mxu0 0
    %954 = vmatprep.subr.bf16.mxu0 0
    %955 = vmatpush1.bf16.msra.mxu0 0
    %956 = vmatprep.subr.bf16.mxu0 0
    %957 = vmatpush1.bf16.msra.mxu0 0
    %958 = vmatprep.subr.bf16.mxu0 0
    %959 = vmatpush1.bf16.msra.mxu0 0
    %960 = vmatprep.subr.bf16.mxu0 0
    %961 = vmatpush1.bf16.msra.mxu0 0
    %962 = vmatprep.subr.bf16.mxu0 0
    %963 = vmatpush1.bf16.msra.mxu0 0
    %964 = vmatprep.subr.bf16.mxu0 0
    %965 = vmatpush1.bf16.msra.mxu0 0
    %966 = vmatprep.subr.bf16.mxu0 0
    %967 = vmatpush1.bf16.msra.mxu0 0
    %968 = vmatprep.mubr.bf16.mxu0 0
    %969 = vmatmul.mubr.bf16.gmra.mrb[0].mxu0 %v935
    %v970 = vpop.f32.mrb[0].mxu0
    %v971 = vadd.f32 0.0, %v970
    %v972 = vpop.f32.mrb[0].mxu0
    %v973 = vpop.f32.mrb[0].mxu0
    %v974 = vpop.f32.mrb[0].mxu0
    %975 = vdwg.mxu0
    %s976 = smul.u32 2, 3
    %s977 = smul.addr %s976, 8
    %s978 = scalar_lea.vmem [#allocation2], %s977
    %v979 = vld [vmem:[%s978] sm:$0xff]
    %v980 = vadd.f32 %v979, %v971
    %v981 = vxor.u32 %v980, 2147483648
    %v982 = vmul.f32 %v981, 1.442695
    %v983 = vpow.pop %v982
    %v984 = vadd.f32 %v983, 1.0
    %v985 = vrcp.pop %v984
    %v986 = vmul.f32 1.0, %v985
    %987 = vmatprep.subr.bf16.mxu0 0
    %988 = vmatpush1.bf16.msra.mxu0 %v611
    %989 = vmatprep.subr.bf16.mxu0 0
    %990 = vmatpush1.bf16.msra.mxu0 %v612
    %991 = vmatprep.subr.bf16.mxu0 0
    %992 = vmatpush1.bf16.msra.mxu0 %v613
    %993 = vmatprep.subr.bf16.mxu0 0
    %994 = vmatpush1.bf16.msra.mxu0 %v614
    %995 = vmatprep.subr.bf16.mxu0 0
    %996 = vmatpush1.bf16.msra.mxu0 %v615
    %997 = vmatprep.subr.bf16.mxu0 0
    %998 = vmatpush1.bf16.msra.mxu0 %v616
    %999 = vmatprep.subr.bf16.mxu0 0
    %1000 = vmatpush1.bf16.msra.mxu0 %v617
    %1001 = vmatprep.subr.bf16.mxu0 0
    %1002 = vmatpush1.bf16.msra.mxu0 %v618
    %1003 = vmatprep.subr.bf16.mxu0 0
    %1004 = vmatpush1.bf16.msra.mxu0 0
    %1005 = vmatprep.subr.bf16.mxu0 0
    %1006 = vmatpush1.bf16.msra.mxu0 0
    %1007 = vmatprep.subr.bf16.mxu0 0
    %1008 = vmatpush1.bf16.msra.mxu0 0
    %1009 = vmatprep.subr.bf16.mxu0 0
    %1010 = vmatpush1.bf16.msra.mxu0 0
    %1011 = vmatprep.subr.bf16.mxu0 0
    %1012 = vmatpush1.bf16.msra.mxu0 0
    %1013 = vmatprep.subr.bf16.mxu0 0
    %1014 = vmatpush1.bf16.msra.mxu0 0
    %1015 = vmatprep.subr.bf16.mxu0 0
    %1016 = vmatpush1.bf16.msra.mxu0 0
    %1017 = vmatprep.subr.bf16.mxu0 0
    %1018 = vmatpush1.bf16.msra.mxu0 0
    %1019 = vmatprep.mubr.bf16.mxu0 0
    %1020 = vmatmul.mubr.bf16.gmra.mrb[0].mxu0 %v935
    %v1021 = vpop.f32.mrb[0].mxu0
    %v1022 = vadd.f32 0.0, %v1021
    %v1023 = vpop.f32.mrb[0].mxu0
    %v1024 = vpop.f32.mrb[0].mxu0
    %v1025 = vpop.f32.mrb[0].mxu0
    %1026 = vdwg.mxu0
    %v1027 = vld [vmem:[%s978 + $0x8] sm:$0xff]
    %v1028 = vadd.f32 %v1027, %v1022
    %v1029 = vxor.u32 %v1028, 2147483648
    %v1030 = vmul.f32 %v1029, 1.442695
    %v1031 = vpow.pop %v1030
    %v1032 = vadd.f32 %v1031, 1.0
    %v1033 = vrcp.pop %v1032
    %v1034 = vmul.f32 1.0, %v1033
    %v1035 = vld [vmem:[%s978 + $0x10] sm:$0xff]
    %1036 = vmatprep.subr.bf16.mxu0 0
    %1037 = vmatpush1.bf16.msra.mxu0 %v724
    %1038 = vmatprep.subr.bf16.mxu0 0
    %1039 = vmatpush1.bf16.msra.mxu0 %v725
    %1040 = vmatprep.subr.bf16.mxu0 0
    %1041 = vmatpush1.bf16.msra.mxu0 %v726
    %1042 = vmatprep.subr.bf16.mxu0 0
    %1043 = vmatpush1.bf16.msra.mxu0 %v727
    %1044 = vmatprep.subr.bf16.mxu0 0
    %1045 = vmatpush1.bf16.msra.mxu0 %v728
    %1046 = vmatprep.subr.bf16.mxu0 0
    %1047 = vmatpush1.bf16.msra.mxu0 %v729
    %1048 = vmatprep.subr.bf16.mxu0 0
    %1049 = vmatpush1.bf16.msra.mxu0 %v730
    %1050 = vmatprep.subr.bf16.mxu0 0
    %1051 = vmatpush1.bf16.msra.mxu0 %v731
    %1052 = vmatprep.subr.bf16.mxu0 0
    %1053 = vmatpush1.bf16.msra.mxu0 0
    %1054 = vmatprep.subr.bf16.mxu0 0
    %1055 = vmatpush1.bf16.msra.mxu0 0
    %1056 = vmatprep.subr.bf16.mxu0 0
    %1057 = vmatpush1.bf16.msra.mxu0 0
    %1058 = vmatprep.subr.bf16.mxu0 0
    %1059 = vmatpush1.bf16.msra.mxu0 0
    %1060 = vmatprep.subr.bf16.mxu0 0
    %1061 = vmatpush1.bf16.msra.mxu0 0
    %1062 = vmatprep.subr.bf16.mxu0 0
    %1063 = vmatpush1.bf16.msra.mxu0 0
    %1064 = vmatprep.subr.bf16.mxu0 0
    %1065 = vmatpush1.bf16.msra.mxu0 0
    %1066 = vmatprep.subr.bf16.mxu0 0
    %1067 = vmatpush1.bf16.msra.mxu0 0
    %1068 = vmatprep.mubr.bf16.mxu0 0
    %1069 = vmatmul.mubr.bf16.gmra.mrb[0].mxu0 %v935
    %v1070 = vpop.f32.mrb[0].mxu0
    %v1071 = vadd.f32 %v444, %v1070
    %v1072 = vpop.f32.mrb[0].mxu0
    %v1073 = vpop.f32.mrb[0].mxu0
    %v1074 = vpop.f32.mrb[0].mxu0
    %1075 = vdwg.mxu0
    %v1076 = vmul.f32 %v986, %v1071
    %v1077 = vadd.f32 %v1035, %v1076
    %v1078 = vtanh.pop %v1077
    %v1079 = vsub.f32 1.0, %v1034
    %v1080 = vmul.f32 %v1079, %v1078
    %v1081 = vmul.f32 %v1034, %v934
    %v1082 = vadd.f32 %v1080, %v1081
    %v1083 = vpack.c.bf16 %v1082, %v1082
    %1084 = vmatprep.subr.bf16.mxu0 0
    %1085 = vmatpush1.bf16.msra.mxu0 %v496
    %1086 = vmatprep.subr.bf16.mxu0 0
    %1087 = vmatpush1.bf16.msra.mxu0 %v497
    %1088 = vmatprep.subr.bf16.mxu0 0
    %1089 = vmatpush1.bf16.msra.mxu0 %v498
    %1090 = vmatprep.subr.bf16.mxu0 0
    %1091 = vmatpush1.bf16.msra.mxu0 %v499
    %1092 = vmatprep.subr.bf16.mxu0 0
    %1093 = vmatpush1.bf16.msra.mxu0 %v500
    %1094 = vmatprep.subr.bf16.mxu0 0
    %1095 = vmatpush1.bf16.msra.mxu0 %v501
    %1096 = vmatprep.subr.bf16.mxu0 0
    %1097 = vmatpush1.bf16.msra.mxu0 %v502
    %1098 = vmatprep.subr.bf16.mxu0 0
    %1099 = vmatpush1.bf16.msra.mxu0 %v503
    %1100 = vmatprep.subr.bf16.mxu0 0
    %1101 = vmatpush1.bf16.msra.mxu0 0
    %1102 = vmatprep.subr.bf16.mxu0 0
    %1103 = vmatpush1.bf16.msra.mxu0 0
    %1104 = vmatprep.subr.bf16.mxu0 0
    %1105 = vmatpush1.bf16.msra.mxu0 0
    %1106 = vmatprep.subr.bf16.mxu0 0
    %1107 = vmatpush1.bf16.msra.mxu0 0
    %1108 = vmatprep.subr.bf16.mxu0 0
    %1109 = vmatpush1.bf16.msra.mxu0 0
    %1110 = vmatprep.subr.bf16.mxu0 0
    %1111 = vmatpush1.bf16.msra.mxu0 0
    %1112 = vmatprep.subr.bf16.mxu0 0
    %1113 = vmatpush1.bf16.msra.mxu0 0
    %1114 = vmatprep.subr.bf16.mxu0 0
    %1115 = vmatpush1.bf16.msra.mxu0 0
    %1116 = vmatprep.mubr.bf16.mxu0 0
    %1117 = vmatmul.mubr.bf16.gmra.mrb[0].mxu0 %v1083
    %v1118 = vpop.f32.mrb[0].mxu0
    %v1119 = vadd.f32 0.0, %v1118
    %v1120 = vpop.f32.mrb[0].mxu0
    %v1121 = vpop.f32.mrb[0].mxu0
    %v1122 = vpop.f32.mrb[0].mxu0
    %1123 = vdwg.mxu0
    %s1124 = smul.u32 3, 3
    %s1125 = smul.addr %s1124, 8
    %s1126 = scalar_lea.vmem [#allocation2], %s1125
    %v1127 = vld [vmem:[%s1126] sm:$0xff]
    %v1128 = vadd.f32 %v1127, %v1119
    %v1129 = vxor.u32 %v1128, 2147483648
    %v1130 = vmul.f32 %v1129, 1.442695
    %v1131 = vpow.pop %v1130
    %v1132 = vadd.f32 %v1131, 1.0
    %v1133 = vrcp.pop %v1132
    %v1134 = vmul.f32 1.0, %v1133
    %1135 = vmatprep.subr.bf16.mxu0 0
    %1136 = vmatpush1.bf16.msra.mxu0 %v611
    %1137 = vmatprep.subr.bf16.mxu0 0
    %1138 = vmatpush1.bf16.msra.mxu0 %v612
    %1139 = vmatprep.subr.bf16.mxu0 0
    %1140 = vmatpush1.bf16.msra.mxu0 %v613
    %1141 = vmatprep.subr.bf16.mxu0 0
    %1142 = vmatpush1.bf16.msra.mxu0 %v614
    %1143 = vmatprep.subr.bf16.mxu0 0
    %1144 = vmatpush1.bf16.msra.mxu0 %v615
    %1145 = vmatprep.subr.bf16.mxu0 0
    %1146 = vmatpush1.bf16.msra.mxu0 %v616
    %1147 = vmatprep.subr.bf16.mxu0 0
    %1148 = vmatpush1.bf16.msra.mxu0 %v617
    %1149 = vmatprep.subr.bf16.mxu0 0
    %1150 = vmatpush1.bf16.msra.mxu0 %v618
    %1151 = vmatprep.subr.bf16.mxu0 0
    %1152 = vmatpush1.bf16.msra.mxu0 0
    %1153 = vmatprep.subr.bf16.mxu0 0
    %1154 = vmatpush1.bf16.msra.mxu0 0
    %1155 = vmatprep.subr.bf16.mxu0 0
    %1156 = vmatpush1.bf16.msra.mxu0 0
    %1157 = vmatprep.subr.bf16.mxu0 0
    %1158 = vmatpush1.bf16.msra.mxu0 0
    %1159 = vmatprep.subr.bf16.mxu0 0
    %1160 = vmatpush1.bf16.msra.mxu0 0
    %1161 = vmatprep.subr.bf16.mxu0 0
    %1162 = vmatpush1.bf16.msra.mxu0 0
    %1163 = vmatprep.subr.bf16.mxu0 0
    %1164 = vmatpush1.bf16.msra.mxu0 0
    %1165 = vmatprep.subr.bf16.mxu0 0
    %1166 = vmatpush1.bf16.msra.mxu0 0
    %1167 = vmatprep.mubr.bf16.mxu0 0
    %1168 = vmatmul.mubr.bf16.gmra.mrb[0].mxu0 %v1083
    %v1169 = vpop.f32.mrb[0].mxu0
    %v1170 = vadd.f32 0.0, %v1169
    %v1171 = vpop.f32.mrb[0].mxu0
    %v1172 = vpop.f32.mrb[0].mxu0
    %v1173 = vpop.f32.mrb[0].mxu0
    %1174 = vdwg.mxu0
    %v1175 = vld [vmem:[%s1126 + $0x8] sm:$0xff]
    %v1176 = vadd.f32 %v1175, %v1170
    %v1177 = vxor.u32 %v1176, 2147483648
    %v1178 = vmul.f32 %v1177, 1.442695
    %v1179 = vpow.pop %v1178
    %v1180 = vadd.f32 %v1179, 1.0
    %v1181 = vrcp.pop %v1180
    %v1182 = vmul.f32 1.0, %v1181
    %v1183 = vld [vmem:[%s1126 + $0x10] sm:$0xff]
    %1184 = vmatprep.subr.bf16.mxu0 0
    %1185 = vmatpush1.bf16.msra.mxu0 %v724
    %1186 = vmatprep.subr.bf16.mxu0 0
    %1187 = vmatpush1.bf16.msra.mxu0 %v725
    %1188 = vmatprep.subr.bf16.mxu0 0
    %1189 = vmatpush1.bf16.msra.mxu0 %v726
    %1190 = vmatprep.subr.bf16.mxu0 0
    %1191 = vmatpush1.bf16.msra.mxu0 %v727
    %1192 = vmatprep.subr.bf16.mxu0 0
    %1193 = vmatpush1.bf16.msra.mxu0 %v728
    %1194 = vmatprep.subr.bf16.mxu0 0
    %1195 = vmatpush1.bf16.msra.mxu0 %v729
    %1196 = vmatprep.subr.bf16.mxu0 0
    %1197 = vmatpush1.bf16.msra.mxu0 %v730
    %1198 = vmatprep.subr.bf16.mxu0 0
    %1199 = vmatpush1.bf16.msra.mxu0 %v731
    %1200 = vmatprep.subr.bf16.mxu0 0
    %1201 = vmatpush1.bf16.msra.mxu0 0
    %1202 = vmatprep.subr.bf16.mxu0 0
    %1203 = vmatpush1.bf16.msra.mxu0 0
    %1204 = vmatprep.subr.bf16.mxu0 0
    %1205 = vmatpush1.bf16.msra.mxu0 0
    %1206 = vmatprep.subr.bf16.mxu0 0
    %1207 = vmatpush1.bf16.msra.mxu0 0
    %1208 = vmatprep.subr.bf16.mxu0 0
    %1209 = vmatpush1.bf16.msra.mxu0 0
    %1210 = vmatprep.subr.bf16.mxu0 0
    %1211 = vmatpush1.bf16.msra.mxu0 0
    %1212 = vmatprep.subr.bf16.mxu0 0
    %1213 = vmatpush1.bf16.msra.mxu0 0
    %1214 = vmatprep.subr.bf16.mxu0 0
    %1215 = vmatpush1.bf16.msra.mxu0 0
    %1216 = vmatprep.mubr.bf16.mxu0 0
    %1217 = vmatmul.mubr.bf16.gmra.mrb[0].mxu0 %v1083
    %v1218 = vpop.f32.mrb[0].mxu0
    %v1219 = vadd.f32 %v444, %v1218
    %v1220 = vpop.f32.mrb[0].mxu0
    %v1221 = vpop.f32.mrb[0].mxu0
    %v1222 = vpop.f32.mrb[0].mxu0
    %1223 = vdwg.mxu0
    %v1224 = vmul.f32 %v1134, %v1219
    %v1225 = vadd.f32 %v1183, %v1224
    %v1226 = vtanh.pop %v1225
    %v1227 = vsub.f32 1.0, %v1182
    %v1228 = vmul.f32 %v1227, %v1226
    %v1229 = vmul.f32 %v1182, %v1082
    %v1230 = vadd.f32 %v1228, %v1229
    %v1231 = vpack.c.bf16 %v1230, %v1230
    %1232 = vmatprep.subr.bf16.mxu0 0
    %1233 = vmatpush1.bf16.msra.mxu0 %v496
    %1234 = vmatprep.subr.bf16.mxu0 0
    %1235 = vmatpush1.bf16.msra.mxu0 %v497
    %1236 = vmatprep.subr.bf16.mxu0 0
    %1237 = vmatpush1.bf16.msra.mxu0 %v498
    %1238 = vmatprep.subr.bf16.mxu0 0
    %1239 = vmatpush1.bf16.msra.mxu0 %v499
    %1240 = vmatprep.subr.bf16.mxu0 0
    %1241 = vmatpush1.bf16.msra.mxu0 %v500
    %1242 = vmatprep.subr.bf16.mxu0 0
    %1243 = vmatpush1.bf16.msra.mxu0 %v501
    %1244 = vmatprep.subr.bf16.mxu0 0
    %1245 = vmatpush1.bf16.msra.mxu0 %v502
    %1246 = vmatprep.subr.bf16.mxu0 0
    %1247 = vmatpush1.bf16.msra.mxu0 %v503
    %1248 = vmatprep.subr.bf16.mxu0 0
    %1249 = vmatpush1.bf16.msra.mxu0 0
    %1250 = vmatprep.subr.bf16.mxu0 0
    %1251 = vmatpush1.bf16.msra.mxu0 0
    %1252 = vmatprep.subr.bf16.mxu0 0
    %1253 = vmatpush1.bf16.msra.mxu0 0
    %1254 = vmatprep.subr.bf16.mxu0 0
    %1255 = vmatpush1.bf16.msra.mxu0 0
    %1256 = vmatprep.subr.bf16.mxu0 0
    %1257 = vmatpush1.bf16.msra.mxu0 0
    %1258 = vmatprep.subr.bf16.mxu0 0
    %1259 = vmatpush1.bf16.msra.mxu0 0
    %1260 = vmatprep.subr.bf16.mxu0 0
    %1261 = vmatpush1.bf16.msra.mxu0 0
    %1262 = vmatprep.subr.bf16.mxu0 0
    %1263 = vmatpush1.bf16.msra.mxu0 0
    %1264 = vmatprep.mubr.bf16.mxu0 0
    %1265 = vmatmul.mubr.bf16.gmra.mrb[0].mxu0 %v1231
    %v1266 = vpop.f32.mrb[0].mxu0
    %v1267 = vadd.f32 0.0, %v1266
    %v1268 = vpop.f32.mrb[0].mxu0
    %v1269 = vpop.f32.mrb[0].mxu0
    %v1270 = vpop.f32.mrb[0].mxu0
    %1271 = vdwg.mxu0
    %s1272 = smul.u32 4, 3
    %s1273 = smul.addr %s1272, 8
    %s1274 = scalar_lea.vmem [#allocation2], %s1273
    %v1275 = vld [vmem:[%s1274] sm:$0xff]
    %v1276 = vadd.f32 %v1275, %v1267
    %v1277 = vxor.u32 %v1276, 2147483648
    %v1278 = vmul.f32 %v1277, 1.442695
    %v1279 = vpow.pop %v1278
    %v1280 = vadd.f32 %v1279, 1.0
    %v1281 = vrcp.pop %v1280
    %v1282 = vmul.f32 1.0, %v1281
    %1283 = vmatprep.subr.bf16.mxu0 0
    %1284 = vmatpush1.bf16.msra.mxu0 %v611
    %1285 = vmatprep.subr.bf16.mxu0 0
    %1286 = vmatpush1.bf16.msra.mxu0 %v612
    %1287 = vmatprep.subr.bf16.mxu0 0
    %1288 = vmatpush1.bf16.msra.mxu0 %v613
    %1289 = vmatprep.subr.bf16.mxu0 0
    %1290 = vmatpush1.bf16.msra.mxu0 %v614
    %1291 = vmatprep.subr.bf16.mxu0 0
    %1292 = vmatpush1.bf16.msra.mxu0 %v615
    %1293 = vmatprep.subr.bf16.mxu0 0
    %1294 = vmatpush1.bf16.msra.mxu0 %v616
    %1295 = vmatprep.subr.bf16.mxu0 0
    %1296 = vmatpush1.bf16.msra.mxu0 %v617
    %1297 = vmatprep.subr.bf16.mxu0 0
    %1298 = vmatpush1.bf16.msra.mxu0 %v618
    %1299 = vmatprep.subr.bf16.mxu0 0
    %1300 = vmatpush1.bf16.msra.mxu0 0
    %1301 = vmatprep.subr.bf16.mxu0 0
    %1302 = vmatpush1.bf16.msra.mxu0 0
    %1303 = vmatprep.subr.bf16.mxu0 0
    %1304 = vmatpush1.bf16.msra.mxu0 0
    %1305 = vmatprep.subr.bf16.mxu0 0
    %1306 = vmatpush1.bf16.msra.mxu0 0
    %1307 = vmatprep.subr.bf16.mxu0 0
    %1308 = vmatpush1.bf16.msra.mxu0 0
    %1309 = vmatprep.subr.bf16.mxu0 0
    %1310 = vmatpush1.bf16.msra.mxu0 0
    %1311 = vmatprep.subr.bf16.mxu0 0
    %1312 = vmatpush1.bf16.msra.mxu0 0
    %1313 = vmatprep.subr.bf16.mxu0 0
    %1314 = vmatpush1.bf16.msra.mxu0 0
    %1315 = vmatprep.mubr.bf16.mxu0 0
    %1316 = vmatmul.mubr.bf16.gmra.mrb[0].mxu0 %v1231
    %v1317 = vpop.f32.mrb[0].mxu0
    %v1318 = vadd.f32 0.0, %v1317
    %v1319 = vpop.f32.mrb[0].mxu0
    %v1320 = vpop.f32.mrb[0].mxu0
    %v1321 = vpop.f32.mrb[0].mxu0
    %1322 = vdwg.mxu0
    %v1323 = vld [vmem:[%s1274 + $0x8] sm:$0xff]
    %v1324 = vadd.f32 %v1323, %v1318
    %v1325 = vxor.u32 %v1324, 2147483648
    %v1326 = vmul.f32 %v1325, 1.442695
    %v1327 = vpow.pop %v1326
    %v1328 = vadd.f32 %v1327, 1.0
    %v1329 = vrcp.pop %v1328
    %v1330 = vmul.f32 1.0, %v1329
    %v1331 = vld [vmem:[%s1274 + $0x10] sm:$0xff]
    %1332 = vmatprep.subr.bf16.mxu0 0
    %1333 = vmatpush1.bf16.msra.mxu0 %v724
    %1334 = vmatprep.subr.bf16.mxu0 0
    %1335 = vmatpush1.bf16.msra.mxu0 %v725
    %1336 = vmatprep.subr.bf16.mxu0 0
    %1337 = vmatpush1.bf16.msra.mxu0 %v726
    %1338 = vmatprep.subr.bf16.mxu0 0
    %1339 = vmatpush1.bf16.msra.mxu0 %v727
    %1340 = vmatprep.subr.bf16.mxu0 0
    %1341 = vmatpush1.bf16.msra.mxu0 %v728
    %1342 = vmatprep.subr.bf16.mxu0 0
    %1343 = vmatpush1.bf16.msra.mxu0 %v729
    %1344 = vmatprep.subr.bf16.mxu0 0
    %1345 = vmatpush1.bf16.msra.mxu0 %v730
    %1346 = vmatprep.subr.bf16.mxu0 0
    %1347 = vmatpush1.bf16.msra.mxu0 %v731
    %1348 = vmatprep.subr.bf16.mxu0 0
    %1349 = vmatpush1.bf16.msra.mxu0 0
    %1350 = vmatprep.subr.bf16.mxu0 0
    %1351 = vmatpush1.bf16.msra.mxu0 0
    %1352 = vmatprep.subr.bf16.mxu0 0
    %1353 = vmatpush1.bf16.msra.mxu0 0
    %1354 = vmatprep.subr.bf16.mxu0 0
    %1355 = vmatpush1.bf16.msra.mxu0 0
    %1356 = vmatprep.subr.bf16.mxu0 0
    %1357 = vmatpush1.bf16.msra.mxu0 0
    %1358 = vmatprep.subr.bf16.mxu0 0
    %1359 = vmatpush1.bf16.msra.mxu0 0
    %1360 = vmatprep.subr.bf16.mxu0 0
    %1361 = vmatpush1.bf16.msra.mxu0 0
    %1362 = vmatprep.subr.bf16.mxu0 0
    %1363 = vmatpush1.bf16.msra.mxu0 0
    %1364 = vmatprep.mubr.bf16.mxu0 0
    %1365 = vmatmul.mubr.bf16.gmra.mrb[0].mxu0 %v1231
    %v1366 = vpop.f32.mrb[0].mxu0
    %v1367 = vadd.f32 %v444, %v1366
    %v1368 = vpop.f32.mrb[0].mxu0
    %v1369 = vpop.f32.mrb[0].mxu0
    %v1370 = vpop.f32.mrb[0].mxu0
    %1371 = vdwg.mxu0
    %v1372 = vmul.f32 %v1282, %v1367
    %v1373 = vadd.f32 %v1331, %v1372
    %v1374 = vtanh.pop %v1373
    %v1375 = vsub.f32 1.0, %v1330
    %v1376 = vmul.f32 %v1375, %v1374
    %v1377 = vmul.f32 %v1330, %v1230
    %v1378 = vadd.f32 %v1376, %v1377
    %v1379 = vpack.c.bf16 %v1378, %v1378
    %1380 = vmatprep.subr.bf16.mxu0 0
    %1381 = vmatpush1.bf16.msra.mxu0 %v496
    %1382 = vmatprep.subr.bf16.mxu0 0
    %1383 = vmatpush1.bf16.msra.mxu0 %v497
    %1384 = vmatprep.subr.bf16.mxu0 0
    %1385 = vmatpush1.bf16.msra.mxu0 %v498
    %1386 = vmatprep.subr.bf16.mxu0 0
    %1387 = vmatpush1.bf16.msra.mxu0 %v499
    %1388 = vmatprep.subr.bf16.mxu0 0
    %1389 = vmatpush1.bf16.msra.mxu0 %v500
    %1390 = vmatprep.subr.bf16.mxu0 0
    %1391 = vmatpush1.bf16.msra.mxu0 %v501
    %1392 = vmatprep.subr.bf16.mxu0 0
    %1393 = vmatpush1.bf16.msra.mxu0 %v502
    %1394 = vmatprep.subr.bf16.mxu0 0
    %1395 = vmatpush1.bf16.msra.mxu0 %v503
    %1396 = vmatprep.subr.bf16.mxu0 0
    %1397 = vmatpush1.bf16.msra.mxu0 0
    %1398 = vmatprep.subr.bf16.mxu0 0
    %1399 = vmatpush1.bf16.msra.mxu0 0
    %1400 = vmatprep.subr.bf16.mxu0 0
    %1401 = vmatpush1.bf16.msra.mxu0 0
    %1402 = vmatprep.subr.bf16.mxu0 0
    %1403 = vmatpush1.bf16.msra.mxu0 0
    %1404 = vmatprep.subr.bf16.mxu0 0
    %1405 = vmatpush1.bf16.msra.mxu0 0
    %1406 = vmatprep.subr.bf16.mxu0 0
    %1407 = vmatpush1.bf16.msra.mxu0 0
    %1408 = vmatprep.subr.bf16.mxu0 0
    %1409 = vmatpush1.bf16.msra.mxu0 0
    %1410 = vmatprep.subr.bf16.mxu0 0
    %1411 = vmatpush1.bf16.msra.mxu0 0
    %1412 = vmatprep.mubr.bf16.mxu0 0
    %1413 = vmatmul.mubr.bf16.gmra.mrb[0].mxu0 %v1379
    %v1414 = vpop.f32.mrb[0].mxu0
    %v1415 = vadd.f32 0.0, %v1414
    %v1416 = vpop.f32.mrb[0].mxu0
    %v1417 = vpop.f32.mrb[0].mxu0
    %v1418 = vpop.f32.mrb[0].mxu0
    %1419 = vdwg.mxu0
    %s1420 = smul.u32 5, 3
    %s1421 = smul.addr %s1420, 8
    %s1422 = scalar_lea.vmem [#allocation2], %s1421
    %v1423 = vld [vmem:[%s1422] sm:$0xff]
    %v1424 = vadd.f32 %v1423, %v1415
    %v1425 = vxor.u32 %v1424, 2147483648
    %v1426 = vmul.f32 %v1425, 1.442695
    %v1427 = vpow.pop %v1426
    %v1428 = vadd.f32 %v1427, 1.0
    %v1429 = vrcp.pop %v1428
    %v1430 = vmul.f32 1.0, %v1429
    %1431 = vmatprep.subr.bf16.mxu0 0
    %1432 = vmatpush1.bf16.msra.mxu0 %v611
    %1433 = vmatprep.subr.bf16.mxu0 0
    %1434 = vmatpush1.bf16.msra.mxu0 %v612
    %1435 = vmatprep.subr.bf16.mxu0 0
    %1436 = vmatpush1.bf16.msra.mxu0 %v613
    %1437 = vmatprep.subr.bf16.mxu0 0
    %1438 = vmatpush1.bf16.msra.mxu0 %v614
    %1439 = vmatprep.subr.bf16.mxu0 0
    %1440 = vmatpush1.bf16.msra.mxu0 %v615
    %1441 = vmatprep.subr.bf16.mxu0 0
    %1442 = vmatpush1.bf16.msra.mxu0 %v616
    %1443 = vmatprep.subr.bf16.mxu0 0
    %1444 = vmatpush1.bf16.msra.mxu0 %v617
    %1445 = vmatprep.subr.bf16.mxu0 0
    %1446 = vmatpush1.bf16.msra.mxu0 %v618
    %1447 = vmatprep.subr.bf16.mxu0 0
    %1448 = vmatpush1.bf16.msra.mxu0 0
    %1449 = vmatprep.subr.bf16.mxu0 0
    %1450 = vmatpush1.bf16.msra.mxu0 0
    %1451 = vmatprep.subr.bf16.mxu0 0
    %1452 = vmatpush1.bf16.msra.mxu0 0
    %1453 = vmatprep.subr.bf16.mxu0 0
    %1454 = vmatpush1.bf16.msra.mxu0 0
    %1455 = vmatprep.subr.bf16.mxu0 0
    %1456 = vmatpush1.bf16.msra.mxu0 0
    %1457 = vmatprep.subr.bf16.mxu0 0
    %1458 = vmatpush1.bf16.msra.mxu0 0
    %1459 = vmatprep.subr.bf16.mxu0 0
    %1460 = vmatpush1.bf16.msra.mxu0 0
    %1461 = vmatprep.subr.bf16.mxu0 0
    %1462 = vmatpush1.bf16.msra.mxu0 0
    %1463 = vmatprep.mubr.bf16.mxu0 0
    %1464 = vmatmul.mubr.bf16.gmra.mrb[0].mxu0 %v1379
    %v1465 = vpop.f32.mrb[0].mxu0
    %v1466 = vadd.f32 0.0, %v1465
    %v1467 = vpop.f32.mrb[0].mxu0
    %v1468 = vpop.f32.mrb[0].mxu0
    %v1469 = vpop.f32.mrb[0].mxu0
    %1470 = vdwg.mxu0
    %v1471 = vld [vmem:[%s1422 + $0x8] sm:$0xff]
    %v1472 = vadd.f32 %v1471, %v1466
    %v1473 = vxor.u32 %v1472, 2147483648
    %v1474 = vmul.f32 %v1473, 1.442695
    %v1475 = vpow.pop %v1474
    %v1476 = vadd.f32 %v1475, 1.0
    %v1477 = vrcp.pop %v1476
    %v1478 = vmul.f32 1.0, %v1477
    %v1479 = vld [vmem:[%s1422 + $0x10] sm:$0xff]
    %1480 = vmatprep.subr.bf16.mxu0 0
    %1481 = vmatpush1.bf16.msra.mxu0 %v724
    %1482 = vmatprep.subr.bf16.mxu0 0
    %1483 = vmatpush1.bf16.msra.mxu0 %v725
    %1484 = vmatprep.subr.bf16.mxu0 0
    %1485 = vmatpush1.bf16.msra.mxu0 %v726
    %1486 = vmatprep.subr.bf16.mxu0 0
    %1487 = vmatpush1.bf16.msra.mxu0 %v727
    %1488 = vmatprep.subr.bf16.mxu0 0
    %1489 = vmatpush1.bf16.msra.mxu0 %v728
    %1490 = vmatprep.subr.bf16.mxu0 0
    %1491 = vmatpush1.bf16.msra.mxu0 %v729
    %1492 = vmatprep.subr.bf16.mxu0 0
    %1493 = vmatpush1.bf16.msra.mxu0 %v730
    %1494 = vmatprep.subr.bf16.mxu0 0
    %1495 = vmatpush1.bf16.msra.mxu0 %v731
    %1496 = vmatprep.subr.bf16.mxu0 0
    %1497 = vmatpush1.bf16.msra.mxu0 0
    %1498 = vmatprep.subr.bf16.mxu0 0
    %1499 = vmatpush1.bf16.msra.mxu0 0
    %1500 = vmatprep.subr.bf16.mxu0 0
    %1501 = vmatpush1.bf16.msra.mxu0 0
    %1502 = vmatprep.subr.bf16.mxu0 0
    %1503 = vmatpush1.bf16.msra.mxu0 0
    %1504 = vmatprep.subr.bf16.mxu0 0
    %1505 = vmatpush1.bf16.msra.mxu0 0
    %1506 = vmatprep.subr.bf16.mxu0 0
    %1507 = vmatpush1.bf16.msra.mxu0 0
    %1508 = vmatprep.subr.bf16.mxu0 0
    %1509 = vmatpush1.bf16.msra.mxu0 0
    %1510 = vmatprep.subr.bf16.mxu0 0
    %1511 = vmatpush1.bf16.msra.mxu0 0
    %1512 = vmatprep.mubr.bf16.mxu0 0
    %1513 = vmatmul.mubr.bf16.gmra.mrb[0].mxu0 %v1379
    %v1514 = vpop.f32.mrb[0].mxu0
    %v1515 = vadd.f32 %v444, %v1514
    %v1516 = vpop.f32.mrb[0].mxu0
    %v1517 = vpop.f32.mrb[0].mxu0
    %v1518 = vpop.f32.mrb[0].mxu0
    %1519 = vdwg.mxu0
    %v1520 = vmul.f32 %v1430, %v1515
    %v1521 = vadd.f32 %v1479, %v1520
    %v1522 = vtanh.pop %v1521
    %v1523 = vsub.f32 1.0, %v1478
    %v1524 = vmul.f32 %v1523, %v1522
    %v1525 = vmul.f32 %v1478, %v1378
    %v1526 = vadd.f32 %v1524, %v1525
    %v1527 = vpack.c.bf16 %v1526, %v1526
    %1528 = vmatprep.subr.bf16.mxu0 0
    %1529 = vmatpush1.bf16.msra.mxu0 %v496
    %1530 = vmatprep.subr.bf16.mxu0 0
    %1531 = vmatpush1.bf16.msra.mxu0 %v497
    %1532 = vmatprep.subr.bf16.mxu0 0
    %1533 = vmatpush1.bf16.msra.mxu0 %v498
    %1534 = vmatprep.subr.bf16.mxu0 0
    %1535 = vmatpush1.bf16.msra.mxu0 %v499
    %1536 = vmatprep.subr.bf16.mxu0 0
    %1537 = vmatpush1.bf16.msra.mxu0 %v500
    %1538 = vmatprep.subr.bf16.mxu0 0
    %1539 = vmatpush1.bf16.msra.mxu0 %v501
    %1540 = vmatprep.subr.bf16.mxu0 0
    %1541 = vmatpush1.bf16.msra.mxu0 %v502
    %1542 = vmatprep.subr.bf16.mxu0 0
    %1543 = vmatpush1.bf16.msra.mxu0 %v503
    %1544 = vmatprep.subr.bf16.mxu0 0
    %1545 = vmatpush1.bf16.msra.mxu0 0
    %1546 = vmatprep.subr.bf16.mxu0 0
    %1547 = vmatpush1.bf16.msra.mxu0 0
    %1548 = vmatprep.subr.bf16.mxu0 0
    %1549 = vmatpush1.bf16.msra.mxu0 0
    %1550 = vmatprep.subr.bf16.mxu0 0
    %1551 = vmatpush1.bf16.msra.mxu0 0
    %1552 = vmatprep.subr.bf16.mxu0 0
    %1553 = vmatpush1.bf16.msra.mxu0 0
    %1554 = vmatprep.subr.bf16.mxu0 0
    %1555 = vmatpush1.bf16.msra.mxu0 0
    %1556 = vmatprep.subr.bf16.mxu0 0
    %1557 = vmatpush1.bf16.msra.mxu0 0
    %1558 = vmatprep.subr.bf16.mxu0 0
    %1559 = vmatpush1.bf16.msra.mxu0 0
    %1560 = vmatprep.mubr.bf16.mxu0 0
    %1561 = vmatmul.mubr.bf16.gmra.mrb[0].mxu0 %v1527
    %v1562 = vpop.f32.mrb[0].mxu0
    %v1563 = vadd.f32 0.0, %v1562
    %v1564 = vpop.f32.mrb[0].mxu0
    %v1565 = vpop.f32.mrb[0].mxu0
    %v1566 = vpop.f32.mrb[0].mxu0
    %1567 = vdwg.mxu0
    %s1568 = smul.u32 6, 3
    %s1569 = smul.addr %s1568, 8
    %s1570 = scalar_lea.vmem [#allocation2], %s1569
    %v1571 = vld [vmem:[%s1570] sm:$0xff]
    %v1572 = vadd.f32 %v1571, %v1563
    %v1573 = vxor.u32 %v1572, 2147483648
    %v1574 = vmul.f32 %v1573, 1.442695
    %v1575 = vpow.pop %v1574
    %v1576 = vadd.f32 %v1575, 1.0
    %v1577 = vrcp.pop %v1576
    %v1578 = vmul.f32 1.0, %v1577
    %1579 = vmatprep.subr.bf16.mxu0 0
    %1580 = vmatpush1.bf16.msra.mxu0 %v611
    %1581 = vmatprep.subr.bf16.mxu0 0
    %1582 = vmatpush1.bf16.msra.mxu0 %v612
    %1583 = vmatprep.subr.bf16.mxu0 0
    %1584 = vmatpush1.bf16.msra.mxu0 %v613
    %1585 = vmatprep.subr.bf16.mxu0 0
    %1586 = vmatpush1.bf16.msra.mxu0 %v614
    %1587 = vmatprep.subr.bf16.mxu0 0
    %1588 = vmatpush1.bf16.msra.mxu0 %v615
    %1589 = vmatprep.subr.bf16.mxu0 0
    %1590 = vmatpush1.bf16.msra.mxu0 %v616
    %1591 = vmatprep.subr.bf16.mxu0 0
    %1592 = vmatpush1.bf16.msra.mxu0 %v617
    %1593 = vmatprep.subr.bf16.mxu0 0
    %1594 = vmatpush1.bf16.msra.mxu0 %v618
    %1595 = vmatprep.subr.bf16.mxu0 0
    %1596 = vmatpush1.bf16.msra.mxu0 0
    %1597 = vmatprep.subr.bf16.mxu0 0
    %1598 = vmatpush1.bf16.msra.mxu0 0
    %1599 = vmatprep.subr.bf16.mxu0 0
    %1600 = vmatpush1.bf16.msra.mxu0 0
    %1601 = vmatprep.subr.bf16.mxu0 0
    %1602 = vmatpush1.bf16.msra.mxu0 0
    %1603 = vmatprep.subr.bf16.mxu0 0
    %1604 = vmatpush1.bf16.msra.mxu0 0
    %1605 = vmatprep.subr.bf16.mxu0 0
    %1606 = vmatpush1.bf16.msra.mxu0 0
    %1607 = vmatprep.subr.bf16.mxu0 0
    %1608 = vmatpush1.bf16.msra.mxu0 0
    %1609 = vmatprep.subr.bf16.mxu0 0
    %1610 = vmatpush1.bf16.msra.mxu0 0
    %1611 = vmatprep.mubr.bf16.mxu0 0
    %1612 = vmatmul.mubr.bf16.gmra.mrb[0].mxu0 %v1527
    %v1613 = vpop.f32.mrb[0].mxu0
    %v1614 = vadd.f32 0.0, %v1613
    %v1615 = vpop.f32.mrb[0].mxu0
    %v1616 = vpop.f32.mrb[0].mxu0
    %v1617 = vpop.f32.mrb[0].mxu0
    %1618 = vdwg.mxu0
    %v1619 = vld [vmem:[%s1570 + $0x8] sm:$0xff]
    %v1620 = vadd.f32 %v1619, %v1614
    %v1621 = vxor.u32 %v1620, 2147483648
    %v1622 = vmul.f32 %v1621, 1.442695
    %v1623 = vpow.pop %v1622
    %v1624 = vadd.f32 %v1623, 1.0
    %v1625 = vrcp.pop %v1624
    %v1626 = vmul.f32 1.0, %v1625
    %v1627 = vld [vmem:[%s1570 + $0x10] sm:$0xff]
    %1628 = vmatprep.subr.bf16.mxu0 0
    %1629 = vmatpush1.bf16.msra.mxu0 %v724
    %1630 = vmatprep.subr.bf16.mxu0 0
    %1631 = vmatpush1.bf16.msra.mxu0 %v725
    %1632 = vmatprep.subr.bf16.mxu0 0
    %1633 = vmatpush1.bf16.msra.mxu0 %v726
    %1634 = vmatprep.subr.bf16.mxu0 0
    %1635 = vmatpush1.bf16.msra.mxu0 %v727
    %1636 = vmatprep.subr.bf16.mxu0 0
    %1637 = vmatpush1.bf16.msra.mxu0 %v728
    %1638 = vmatprep.subr.bf16.mxu0 0
    %1639 = vmatpush1.bf16.msra.mxu0 %v729
    %1640 = vmatprep.subr.bf16.mxu0 0
    %1641 = vmatpush1.bf16.msra.mxu0 %v730
    %1642 = vmatprep.subr.bf16.mxu0 0
    %1643 = vmatpush1.bf16.msra.mxu0 %v731
    %1644 = vmatprep.subr.bf16.mxu0 0
    %1645 = vmatpush1.bf16.msra.mxu0 0
    %1646 = vmatprep.subr.bf16.mxu0 0
    %1647 = vmatpush1.bf16.msra.mxu0 0
    %1648 = vmatprep.subr.bf16.mxu0 0
    %1649 = vmatpush1.bf16.msra.mxu0 0
    %1650 = vmatprep.subr.bf16.mxu0 0
    %1651 = vmatpush1.bf16.msra.mxu0 0
    %1652 = vmatprep.subr.bf16.mxu0 0
    %1653 = vmatpush1.bf16.msra.mxu0 0
    %1654 = vmatprep.subr.bf16.mxu0 0
    %1655 = vmatpush1.bf16.msra.mxu0 0
    %1656 = vmatprep.subr.bf16.mxu0 0
    %1657 = vmatpush1.bf16.msra.mxu0 0
    %1658 = vmatprep.subr.bf16.mxu0 0
    %1659 = vmatpush1.bf16.msra.mxu0 0
    %1660 = vmatprep.mubr.bf16.mxu0 0
    %1661 = vmatmul.mubr.bf16.gmra.mrb[0].mxu0 %v1527
    %v1662 = vpop.f32.mrb[0].mxu0
    %v1663 = vadd.f32 %v444, %v1662
    %v1664 = vpop.f32.mrb[0].mxu0
    %v1665 = vpop.f32.mrb[0].mxu0
    %v1666 = vpop.f32.mrb[0].mxu0
    %1667 = vdwg.mxu0
    %v1668 = vmul.f32 %v1578, %v1663
    %v1669 = vadd.f32 %v1627, %v1668
    %v1670 = vtanh.pop %v1669
    %v1671 = vsub.f32 1.0, %v1626
    %v1672 = vmul.f32 %v1671, %v1670
    %v1673 = vmul.f32 %v1626, %v1526
    %v1674 = vadd.f32 %v1672, %v1673
    %v1675 = vpack.c.bf16 %v1674, %v1674
    %1676 = vmatprep.subr.bf16.mxu0 0
    %1677 = vmatpush1.bf16.msra.mxu0 %v496
    %1678 = vmatprep.subr.bf16.mxu0 0
    %1679 = vmatpush1.bf16.msra.mxu0 %v497
    %1680 = vmatprep.subr.bf16.mxu0 0
    %1681 = vmatpush1.bf16.msra.mxu0 %v498
    %1682 = vmatprep.subr.bf16.mxu0 0
    %1683 = vmatpush1.bf16.msra.mxu0 %v499
    %1684 = vmatprep.subr.bf16.mxu0 0
    %1685 = vmatpush1.bf16.msra.mxu0 %v500
    %1686 = vmatprep.subr.bf16.mxu0 0
    %1687 = vmatpush1.bf16.msra.mxu0 %v501
    %1688 = vmatprep.subr.bf16.mxu0 0
    %1689 = vmatpush1.bf16.msra.mxu0 %v502
    %1690 = vmatprep.subr.bf16.mxu0 0
    %1691 = vmatpush1.bf16.msra.mxu0 %v503
    %1692 = vmatprep.subr.bf16.mxu0 0
    %1693 = vmatpush1.bf16.msra.mxu0 0
    %1694 = vmatprep.subr.bf16.mxu0 0
    %1695 = vmatpush1.bf16.msra.mxu0 0
    %1696 = vmatprep.subr.bf16.mxu0 0
    %1697 = vmatpush1.bf16.msra.mxu0 0
    %1698 = vmatprep.subr.bf16.mxu0 0
    %1699 = vmatpush1.bf16.msra.mxu0 0
    %1700 = vmatprep.subr.bf16.mxu0 0
    %1701 = vmatpush1.bf16.msra.mxu0 0
    %1702 = vmatprep.subr.bf16.mxu0 0
    %1703 = vmatpush1.bf16.msra.mxu0 0
    %1704 = vmatprep.subr.bf16.mxu0 0
    %1705 = vmatpush1.bf16.msra.mxu0 0
    %1706 = vmatprep.subr.bf16.mxu0 0
    %1707 = vmatpush1.bf16.msra.mxu0 0
    %1708 = vmatprep.mubr.bf16.mxu0 0
    %1709 = vmatmul.mubr.bf16.gmra.mrb[0].mxu0 %v1675
    %v1710 = vpop.f32.mrb[0].mxu0
    %v1711 = vadd.f32 0.0, %v1710
    %v1712 = vpop.f32.mrb[0].mxu0
    %v1713 = vpop.f32.mrb[0].mxu0
    %v1714 = vpop.f32.mrb[0].mxu0
    %1715 = vdwg.mxu0
    %s1716 = smul.u32 7, 3
    %s1717 = smul.addr %s1716, 8
    %s1718 = scalar_lea.vmem [#allocation2], %s1717
    %v1719 = vld [vmem:[%s1718] sm:$0xff]
    %v1720 = vadd.f32 %v1719, %v1711
    %v1721 = vxor.u32 %v1720, 2147483648
    %v1722 = vmul.f32 %v1721, 1.442695
    %v1723 = vpow.pop %v1722
    %v1724 = vadd.f32 %v1723, 1.0
    %v1725 = vrcp.pop %v1724
    %v1726 = vmul.f32 1.0, %v1725
    %1727 = vmatprep.subr.bf16.mxu0 0
    %1728 = vmatpush1.bf16.msra.mxu0 %v611
    %1729 = vmatprep.subr.bf16.mxu0 0
    %1730 = vmatpush1.bf16.msra.mxu0 %v612
    %1731 = vmatprep.subr.bf16.mxu0 0
    %1732 = vmatpush1.bf16.msra.mxu0 %v613
    %1733 = vmatprep.subr.bf16.mxu0 0
    %1734 = vmatpush1.bf16.msra.mxu0 %v614
    %1735 = vmatprep.subr.bf16.mxu0 0
    %1736 = vmatpush1.bf16.msra.mxu0 %v615
    %1737 = vmatprep.subr.bf16.mxu0 0
    %1738 = vmatpush1.bf16.msra.mxu0 %v616
    %1739 = vmatprep.subr.bf16.mxu0 0
    %1740 = vmatpush1.bf16.msra.mxu0 %v617
    %1741 = vmatprep.subr.bf16.mxu0 0
    %1742 = vmatpush1.bf16.msra.mxu0 %v618
    %1743 = vmatprep.subr.bf16.mxu0 0
    %1744 = vmatpush1.bf16.msra.mxu0 0
    %1745 = vmatprep.subr.bf16.mxu0 0
    %1746 = vmatpush1.bf16.msra.mxu0 0
    %1747 = vmatprep.subr.bf16.mxu0 0
    %1748 = vmatpush1.bf16.msra.mxu0 0
    %1749 = vmatprep.subr.bf16.mxu0 0
    %1750 = vmatpush1.bf16.msra.mxu0 0
    %1751 = vmatprep.subr.bf16.mxu0 0
    %1752 = vmatpush1.bf16.msra.mxu0 0
    %1753 = vmatprep.subr.bf16.mxu0 0
    %1754 = vmatpush1.bf16.msra.mxu0 0
    %1755 = vmatprep.subr.bf16.mxu0 0
    %1756 = vmatpush1.bf16.msra.mxu0 0
    %1757 = vmatprep.subr.bf16.mxu0 0
    %1758 = vmatpush1.bf16.msra.mxu0 0
    %1759 = vmatprep.mubr.bf16.mxu0 0
    %1760 = vmatmul.mubr.bf16.gmra.mrb[0].mxu0 %v1675
    %v1761 = vpop.f32.mrb[0].mxu0
    %v1762 = vadd.f32 0.0, %v1761
    %v1763 = vpop.f32.mrb[0].mxu0
    %v1764 = vpop.f32.mrb[0].mxu0
    %v1765 = vpop.f32.mrb[0].mxu0
    %1766 = vdwg.mxu0
    %v1767 = vld [vmem:[%s1718 + $0x8] sm:$0xff]
    %v1768 = vadd.f32 %v1767, %v1762
    %v1769 = vxor.u32 %v1768, 2147483648
    %v1770 = vmul.f32 %v1769, 1.442695
    %v1771 = vpow.pop %v1770
    %v1772 = vadd.f32 %v1771, 1.0
    %v1773 = vrcp.pop %v1772
    %v1774 = vmul.f32 1.0, %v1773
    %v1775 = vld [vmem:[%s1718 + $0x10] sm:$0xff]
    %1776 = vmatprep.subr.bf16.mxu0 0
    %1777 = vmatpush1.bf16.msra.mxu0 %v724
    %1778 = vmatprep.subr.bf16.mxu0 0
    %1779 = vmatpush1.bf16.msra.mxu0 %v725
    %1780 = vmatprep.subr.bf16.mxu0 0
    %1781 = vmatpush1.bf16.msra.mxu0 %v726
    %1782 = vmatprep.subr.bf16.mxu0 0
    %1783 = vmatpush1.bf16.msra.mxu0 %v727
    %1784 = vmatprep.subr.bf16.mxu0 0
    %1785 = vmatpush1.bf16.msra.mxu0 %v728
    %1786 = vmatprep.subr.bf16.mxu0 0
    %1787 = vmatpush1.bf16.msra.mxu0 %v729
    %1788 = vmatprep.subr.bf16.mxu0 0
    %1789 = vmatpush1.bf16.msra.mxu0 %v730
    %1790 = vmatprep.subr.bf16.mxu0 0
    %1791 = vmatpush1.bf16.msra.mxu0 %v731
    %1792 = vmatprep.subr.bf16.mxu0 0
    %1793 = vmatpush1.bf16.msra.mxu0 0
    %1794 = vmatprep.subr.bf16.mxu0 0
    %1795 = vmatpush1.bf16.msra.mxu0 0
    %1796 = vmatprep.subr.bf16.mxu0 0
    %1797 = vmatpush1.bf16.msra.mxu0 0
    %1798 = vmatprep.subr.bf16.mxu0 0
    %1799 = vmatpush1.bf16.msra.mxu0 0
    %1800 = vmatprep.subr.bf16.mxu0 0
    %1801 = vmatpush1.bf16.msra.mxu0 0
    %1802 = vmatprep.subr.bf16.mxu0 0
    %1803 = vmatpush1.bf16.msra.mxu0 0
    %1804 = vmatprep.subr.bf16.mxu0 0
    %1805 = vmatpush1.bf16.msra.mxu0 0
    %1806 = vmatprep.subr.bf16.mxu0 0
    %1807 = vmatpush1.bf16.msra.mxu0 0
    %1808 = vmatprep.mubr.bf16.mxu0 0
    %1809 = vmatmul.mubr.bf16.gmra.mrb[0].mxu0 %v1675
    %v1810 = vpop.f32.mrb[0].mxu0
    %v1811 = vadd.f32 %v444, %v1810
    %v1812 = vpop.f32.mrb[0].mxu0
    %v1813 = vpop.f32.mrb[0].mxu0
    %v1814 = vpop.f32.mrb[0].mxu0
    %1815 = vdwg.mxu0
    %v1816 = vmul.f32 %v1726, %v1811
    %v1817 = vadd.f32 %v1775, %v1816
    %v1818 = vtanh.pop %v1817
    %v1819 = vsub.f32 1.0, %v1774
    %v1820 = vmul.f32 %v1819, %v1818
    %v1821 = vmul.f32 %v1774, %v1674
    %v1822 = vadd.f32 %v1820, %v1821
    %1823 = vst [vmem:[#allocation3] sm:$0xff] %v1822
    // Predicated region
    $region38: #{tpu_custom_call.1} parent=1 // pred_check
      %p1824 = pneg %p63
    $region39: #{tpu_custom_call.1} parent=1 // pred_check_branch
      %1826 = sbr.rel (%p1824) target = $region41
    $region40: #{tpu_custom_call.1} parent=1 // pred_region
      %v1827 = vmul.f32 %v1822, %v1822
      %1828 = vadd.xlane.f32.xlu0 %v1827
      %v1829 = vpop.xlane.xlu0 %1828
      %v1830 = vrsqrt.pop %v1829
      %v1831 = vmin.f32 %v1830, 1e+12
      %v1832 = vmul.f32 %v1822, %v1831
      %1833 = vst [vmem:[#allocation10] sm:$0xff] %v1832
    $region41: #{tpu_custom_call.1} parent=1 // pred_fallthru
      _
    // Predicated region
    $region42: #{tpu_custom_call.1} parent=1 // pred_check
      _
    $region43: #{tpu_custom_call.1} parent=1 // pred_check_branch
      %1835 = sbr.rel (0) target = $region45
    $region44: #{tpu_custom_call.1} parent=1 // pred_region
      %s1837 = ssub.s32 128, 128
      %1838 = vsyncadd [#allocation6], %s1837
      %s1840 = sshll.u32 [#allocation10], 4
      %s1841 = int_to_ptr.vmem [resolvable:$true] %s1840
      %1843 = dma.vmem_to_hbm [thread:$0]  %s1841, 128, %s5, [#allocation6]
    $region45: #{tpu_custom_call.1} parent=1 // pred_fallthru
      _
    // Predicated region
    $region46: #{tpu_custom_call.1} parent=1 // pred_check
      _
    $region47: #{tpu_custom_call.1} parent=1 // pred_check_branch
      %1845 = sbr.rel (0) target = $region49
    $region48: #{tpu_custom_call.1} parent=1 // pred_region
      %1846 = dma.done [#allocation6], 128
    $region49: #{tpu_custom_call.1} parent=1 // pred_fallthru
      _
    %1847 = vsyncpa [#allocation5], 1
    %1848 = vsyncpa [#allocation8], 1
    %1849 = vsyncpa [#allocation6], 1

</llo_original>
